<compile_context>
chip_gen: v6e
topology: v6e:2x2x1
jax: 0.10.0
libtpu: 0.0.40
codegen_flags: <defaults>
</compile_context>

<pallas_src>
import math

import jax
import jax.numpy as jnp
from jax import lax
from jax.experimental import pallas as pl
from jax.experimental.pallas import tpu as pltpu


def _make_kernel(S, H, NH, compute_dtype, softmax_bf16):
    HD = H // NH
    cdt = compute_dtype

    def kernel(x_ref, y_ref,
               wqkv_x_ref, bqkv_x_ref, wqkv_y_ref, bqkv_y_ref,
               wo_ref, bo_ref, wod_ref, bod_ref,
               mba_ref,
               sx_ref, sy_ref, weights_ref):
        h = pl.program_id(1)

        x = x_ref[0]                       # (S, H) compute dtype
        y = y_ref[0]

        w11 = mba_ref[0]
        w12 = mba_ref[1]
        w21 = mba_ref[2]
        w22 = mba_ref[3]

        # ---- per-head fused Q/K/V projection --------------------------------
        # One (S,H)@(H,3*HD) MXU matmul per stream.  The (NH,H,3*HD) weight
        # stacks stay resident in VMEM; the head block is selected by a dynamic
        # index on the LEADING axis (no dynamic lane slicing).  1/sqrt(HD) is
        # already folded into the q columns by the wrapper.
        qkv_x = jnp.dot(x, wqkv_x_ref[h],
                        preferred_element_type=jnp.float32) + bqkv_x_ref[h]
        qkv_y = jnp.dot(y, wqkv_y_ref[h],
                        preferred_element_type=jnp.float32) + bqkv_y_ref[h]

        qh = qkv_x[:, 0 * HD:1 * HD].astype(cdt)
        kh = qkv_x[:, 1 * HD:2 * HD].astype(cdt)
        vh = qkv_x[:, 2 * HD:3 * HD].astype(cdt)
        qdh = qkv_y[:, 0 * HD:1 * HD].astype(cdt)
        kdh = qkv_y[:, 1 * HD:2 * HD].astype(cdt)
        vdh = qkv_y[:, 2 * HD:3 * HD].astype(cdt)

        # ---- fused self+cross scores ----------------------------------------
        # One (S,HD) x (2S,HD) -> (S,2S) matmul per stream (contract last dims,
        # no explicit k transpose); the concatenated key block is shared.
        k_cat = jnp.concatenate([kh, kdh], axis=0)          # (2S, HD)
        dims = (((1,), (1,)), ((), ()))
        s_x = lax.dot_general(qh, k_cat, dims,
                              preferred_element_type=jnp.float32)   # [xx | xy]
        s_y = lax.dot_general(qdh, k_cat, dims,
                              preferred_element_type=jnp.float32)   # [yx | yy]

        def softmax_unnorm(s):
            # exp(s - rowmax), UNNORMALISED, plus the f32 row-sum.  Normalisation
            # is deferred past the PV matmul ((S,HD) multiply instead of (S,S)).
            m = jnp.max(s, axis=-1, keepdims=True)
            z = s - m
            if softmax_bf16:
                e = jnp.exp(z.astype(jnp.bfloat16))         # bf16 EUP (v6e/v7x)
                r = jnp.sum(e.astype(jnp.float32), axis=-1, keepdims=True)
                return e.astype(cdt), r
            e32 = jnp.exp(z)                                # f32 path (v5e)
            return e32.astype(cdt), jnp.sum(e32, axis=-1, keepdims=True)

        e_xx, r_xx = softmax_unnorm(s_x[:, :S])             # self  x
        e_xy, r_xy = softmax_unnorm(s_x[:, S:])             # cross x <- y
        e_yx, r_yx = softmax_unnorm(s_y[:, :S])             # cross y <- x (returned)
        e_yy, r_yy = softmax_unnorm(s_y[:, S:])             # self  y

        # Returned attention weights (queryd @ key^T branch): exact reciprocal so
        # rows sum to 1, stored in the (bf16) weights output block for this head.
        inv_yx = 1.0 / r_yx
        weights_ref[0, 0] = (e_yx * inv_yx).astype(weights_ref.dtype)

        inv_xx = pl.reciprocal(r_xx, approx=True)           # EUP slot
        inv_xy = pl.reciprocal(r_xy, approx=True)
        inv_yy = pl.reciprocal(r_yy, approx=True)

        def pv(e, v):
            return jnp.dot(e, v, preferred_element_type=jnp.float32)

        # Deferred-normalised, mba-mixed per-head contexts (S, HD) f32.
        ctxx = pv(e_xx, vh) * (w11 * inv_xx) + pv(e_xy, vdh) * (w12 * inv_xy)
        ctxy = pv(e_yy, vdh) * (w21 * inv_yy) + pv(e_yx, vh) * (w22 * inv_yx)

        # ---- output projection, accumulated head-by-head ---------------------
        # Accumulate straight into the resident f32 output blocks (lane-dense
        # (S,H) stores).  Bias scaled by the sum of the mixing weights is
        # algebraically identical to projecting each branch separately.
        @pl.when(h == 0)
        def _init():
            sx_ref[0] = jnp.broadcast_to((w11 + w12) * bo_ref[...], (S, H))
            sy_ref[0] = jnp.broadcast_to((w21 + w22) * bod_ref[...], (S, H))

        sx_ref[0] += jnp.dot(ctxx.astype(cdt), wo_ref[h],
                             preferred_element_type=jnp.float32)
        sy_ref[0] += jnp.dot(ctxy.astype(cdt), wod_ref[h],
                             preferred_element_type=jnp.float32)

        # TODO(synk): for very large S (>1k) additionally tile queries
        # flash-style (weights block (1,1,TQ,S)) and/or split heads across the
        # two v7x TensorCores via a second "parallel" axis + per-core partials.

    return kernel


def _pack_qkv(wq, wk, wv, bq, bk, bv, num_heads, scale, dtype):
    """(H,H)x3 + (1,H)x3 -> head-stacked (NH,H,3*HD) / (NH,1,3*HD); scale folded into q."""
    H = wq.shape[0]
    HD = H // num_heads

    def cols(w):
        return w.reshape(H, num_heads, HD)

    w = jnp.concatenate([cols(wq) * scale, cols(wk), cols(wv)], axis=-1)
    w = jnp.transpose(w, (1, 0, 2)).astype(dtype)            # (NH, H, 3*HD)

    def bcols(b):
        return b.reshape(1, num_heads, HD)

    bb = jnp.concatenate([bcols(bq) * scale, bcols(bk), bcols(bv)], axis=-1)
    bb = jnp.transpose(bb, (1, 0, 2)).astype(jnp.float32)    # (NH, 1, 3*HD)
    return w, bb


def _vmem_limit_bytes(S, H, NH, HD, cdt_bytes, w_out_bytes):
    """Coarse, padded footprint estimate -> explicit scoped-VMEM budget."""
    def rup(n, m):
        return ((n + m - 1) // m) * m

    Sp, Hp = rup(S, 8), rup(H, 128)
    Sl, S2l, HD3l = rup(S, 128), rup(2 * S, 128), rup(3 * HD, 128)
    Hs, HDs = rup(H, 8), rup(HD, 8)
    params = (2 * NH * Hs * HD3l * cdt_bytes        # wqkv_x / wqkv_y stacks
              + 2 * NH * 8 * HD3l * 4               # bqkv_x / bqkv_y
              + 2 * NH * HDs * Hp * cdt_bytes       # wo / wod stacks
              + 2 * 8 * Hp * 4)                     # bo / bod
    io = (2 * 2 * Sp * Hp * cdt_bytes               # x, y blocks (double-buffered)
          + 2 * 2 * Sp * Hp * 4                     # sx, sy blocks
          + 2 * Sp * Sl * w_out_bytes)              # weights block
    tmp = (2 * Sp * HD3l * 4                        # qkv_x, qkv_y
           + 2 * Sp * S2l * 4                       # fused score tiles
           + 4 * Sp * Sl * (cdt_bytes + 4)          # exp tiles + f32 copies
           + 2 * Sp * Sl * 4                        # normalised p_yx / temporaries
           + 6 * Sp * Hp * 4)                       # contexts / projection temps
    total = params + io + tmp
    return int(min(max(int(1.5 * total) + (8 << 20), 32 << 20), 100 << 20))


def mba_attention(x, y, params, num_heads, *, compute_dtype=jnp.bfloat16,
                  weights_dtype=jnp.bfloat16, softmax_bf16=True):
    """Pallas implementation of Attention.forward with mode='mba', vis=True.

    softmax_bf16: keep True on v6e/v7x (bf16 VPU/EUP paths); pass False on v5e.
    """
    B, S, H = x.shape
    HD = H // num_heads
    cdt = compute_dtype
    scale = 1.0 / math.sqrt(HD)

    wqkv_x, bqkv_x = _pack_qkv(params["wq"], params["wk"], params["wv"],
                               params["bq"], params["bk"], params["bv"],
                               num_heads, scale, cdt)
    wqkv_y, bqkv_y = _pack_qkv(params["wqd"], params["wkd"], params["wvd"],
                               params["bqd"], params["bkd"], params["bvd"],
                               num_heads, scale, cdt)
    wo = params["wo"].reshape(num_heads, HD, H).astype(cdt)      # head-stacked rows
    wod = params["wod"].reshape(num_heads, HD, H).astype(cdt)
    bo = params["bo"].astype(jnp.float32)
    bod = params["bod"].astype(jnp.float32)
    mba = params["mba"].astype(jnp.float32)

    kernel = _make_kernel(S, H, num_heads, cdt, softmax_bf16)

    seq_spec = pl.BlockSpec((1, S, H), lambda b, h: (b, 0, 0))
    # Parameters are constant across the whole grid -> resident, single-buffered.
    vmem_full = pl.BlockSpec(memory_space=pltpu.MemorySpace.VMEM)
    smem_full = pl.BlockSpec(memory_space=pltpu.MemorySpace.SMEM)

    in_specs = [
        seq_spec, seq_spec,                              # x, y
        vmem_full, vmem_full, vmem_full, vmem_full,      # wqkv_x, bqkv_x, wqkv_y, bqkv_y
        vmem_full, vmem_full, vmem_full, vmem_full,      # wo, bo, wod, bod
        smem_full,                                       # mba mixing scalars
    ]
    out_specs = (
        pl.BlockSpec((1, S, H), lambda b, h: (b, 0, 0)),         # sx (accumulated over h)
        pl.BlockSpec((1, S, H), lambda b, h: (b, 0, 0)),         # sy (accumulated over h)
        pl.BlockSpec((1, 1, S, S), lambda b, h: (b, h, 0, 0)),   # weights, per-head block
    )
    out_shape = (
        jax.ShapeDtypeStruct((B, S, H), jnp.float32),
        jax.ShapeDtypeStruct((B, S, H), jnp.float32),
        jax.ShapeDtypeStruct((B, num_heads, S, S), weights_dtype),
    )

    cdt_bytes = jnp.dtype(cdt).itemsize
    w_out_bytes = jnp.dtype(weights_dtype).itemsize
    cost = pl.CostEstimate(
        flops=int(B * (16 * S * H * H + 16 * S * S * H)),
        transcendentals=int(B * 4 * num_heads * S * S),
        bytes_accessed=int(2 * B * S * H * cdt_bytes
                           + 8 * H * H * cdt_bytes
                           + 2 * B * S * H * 4
                           + B * num_heads * S * S * w_out_bytes),
    )

    return pl.pallas_call(
        kernel,
        out_shape=out_shape,
        grid=(B, num_heads),
        in_specs=in_specs,
        out_specs=out_specs,
        compiler_params=pltpu.CompilerParams(
            dimension_semantics=("parallel", "arbitrary"),
            vmem_limit_bytes=_vmem_limit_bytes(S, H, num_heads, HD,
                                               cdt_bytes, w_out_bytes)),
        cost_estimate=cost,
    )(x.astype(cdt), y.astype(cdt),
      wqkv_x, bqkv_x, wqkv_y, bqkv_y, wo, bo, wod, bod, mba)


def ref_attention(x, y, p, num_heads):
    """Pure-JAX f32 reference mirroring the PyTorch forward (mode='mba', eval)."""
    B, S, H = x.shape
    hd = H // num_heads
    scale = 1.0 / math.sqrt(hd)

    def lin(t, w, b):
        return t @ w + b

    def to_heads(t):
        return t.reshape(B, S, num_heads, hd).transpose(0, 2, 1, 3)

    q = to_heads(lin(x, p["wq"], p["bq"][0]))
    k = to_heads(lin(x, p["wk"], p["bk"][0]))
    v = to_heads(lin(x, p["wv"], p["bv"][0]))
    qd = to_heads(lin(y, p["wqd"], p["bqd"][0]))
    kd = to_heads(lin(y, p["wkd"], p["bkd"][0]))
    vd = to_heads(lin(y, p["wvd"], p["bvd"][0]))

    def attn(Q, K, V):
        s = jnp.einsum("bhqd,bhkd->bhqk", Q, K) * scale
        pr = jax.nn.softmax(s, axis=-1)
        ctx = jnp.einsum("bhqk,bhkd->bhqd", pr, V)
        return ctx.transpose(0, 2, 1, 3).reshape(B, S, H), pr

    ctx_xx, _ = attn(q, k, v)
    sx_self = lin(ctx_xx, p["wo"], p["bo"][0])
    ctx_yy, _ = attn(qd, kd, vd)
    sy_self = lin(ctx_yy, p["wod"], p["bod"][0])
    ctx_xy, _ = attn(q, kd, vd)
    cx = lin(ctx_xy, p["wo"], p["bo"][0])
    ctx_yx, w_last = attn(qd, k, v)
    cy = lin(ctx_yx, p["wod"], p["bod"][0])

    w11, w12, w21, w22 = p["mba"]
    sx = w11 * sx_self + w12 * cx
    sy = w21 * sy_self + w22 * cy
    return sx, sy, w_last


if __name__ == "__main__":
    # Small config: batch=2, seq=8, hidden=32, heads=4 (head_size=8).
    B, S, H, NH = 2, 8, 32, 4

    key = jax.random.PRNGKey(0)
    keys = jax.random.split(key, 20)

    def winit(k):
        return (0.02 * jax.random.normal(k, (H, H))).astype(jnp.float32)

    def binit(k):
        return (0.02 * jax.random.normal(k, (1, H))).astype(jnp.float32)

    params = {
        "wq": winit(keys[0]), "bq": binit(keys[1]),
        "wk": winit(keys[2]), "bk": binit(keys[3]),
        "wv": winit(keys[4]), "bv": binit(keys[5]),
        "wo": winit(keys[6]), "bo": binit(keys[7]),
        "wqd": winit(keys[8]), "bqd": binit(keys[9]),
        "wkd": winit(keys[10]), "bkd": binit(keys[11]),
        "wvd": winit(keys[12]), "bvd": binit(keys[13]),
        "wod": winit(keys[14]), "bod": binit(keys[15]),
        # w11, w12, w21, w22 initialized to 0.5 as in the PyTorch module.
        "mba": jnp.array([0.5, 0.5, 0.5, 0.5], dtype=jnp.float32),
    }

    x = jax.random.normal(keys[16], (B, S, H), dtype=jnp.float32)
    y = jax.random.normal(keys[17], (B, S, H), dtype=jnp.float32)

    sx, sy, weights = mba_attention(x, y, params, NH)
    jax.block_until_ready((sx, sy, weights))

    # Sanity check against a pure-JAX f32 reference (bf16 MXU operands, bf16
    # softmax math, bf16 weights output -> loose tolerance).
    rsx, rsy, rw = ref_attention(x, y, params, NH)
    assert jnp.allclose(sx, rsx, atol=2e-2, rtol=2e-2)
    assert jnp.allclose(sy, rsy, atol=2e-2, rtol=2e-2)
    assert jnp.allclose(weights.astype(jnp.float32), rw, atol=2e-2, rtol=2e-2)

    # TODO(synk): dropout (attn_dropout / proj_dropout) is omitted (inference semantics).
    print("KERNEL_OK")
</pallas_src>

<mosaic_0001>
module attributes {stable_mosaic.version = 11 : i64} {
  func.func @kernel(%arg0: i32, %arg1: i32, %arg2: memref<1x8x32xbf16, #tpu.memory_space<vmem>>, %arg3: memref<1x8x32xbf16, #tpu.memory_space<vmem>>, %arg4: memref<4x32x24xbf16, #tpu.memory_space<vmem>>, %arg5: memref<4x1x24xf32, #tpu.memory_space<vmem>>, %arg6: memref<4x32x24xbf16, #tpu.memory_space<vmem>>, %arg7: memref<4x1x24xf32, #tpu.memory_space<vmem>>, %arg8: memref<4x8x32xbf16, #tpu.memory_space<vmem>>, %arg9: memref<1x32xf32, #tpu.memory_space<vmem>>, %arg10: memref<4x8x32xbf16, #tpu.memory_space<vmem>>, %arg11: memref<1x32xf32, #tpu.memory_space<vmem>>, %arg12: memref<4xf32, #tpu.memory_space<smem>>, %arg13: memref<1x8x32xf32, #tpu.memory_space<vmem>>, %arg14: memref<1x8x32xf32, #tpu.memory_space<vmem>>, %arg15: memref<1x1x8x8xbf16, #tpu.memory_space<vmem>>) attributes {dimension_semantics = [#tpu.dimension_semantics<parallel>, #tpu.dimension_semantics<arbitrary>], iteration_bounds = array<i64: 2, 4>, scalar_prefetch = 0 : i64, scratch_operands = 0 : i64, tpu.core_type = #tpu.core_type<tc>, window_params = [{transform_indices = @transform_0, window_bounds = array<i64: 1, 8, 32>}, {transform_indices = @transform_1, window_bounds = array<i64: 1, 8, 32>}, {pipeline_mode = #tpu.pipeline_mode<synchronous>, transform_indices = @transform_2, window_bounds = array<i64: 4, 32, 24>}, {pipeline_mode = #tpu.pipeline_mode<synchronous>, transform_indices = @transform_3, window_bounds = array<i64: 4, 1, 24>}, {pipeline_mode = #tpu.pipeline_mode<synchronous>, transform_indices = @transform_4, window_bounds = array<i64: 4, 32, 24>}, {pipeline_mode = #tpu.pipeline_mode<synchronous>, transform_indices = @transform_5, window_bounds = array<i64: 4, 1, 24>}, {pipeline_mode = #tpu.pipeline_mode<synchronous>, transform_indices = @transform_6, window_bounds = array<i64: 4, 8, 32>}, {pipeline_mode = #tpu.pipeline_mode<synchronous>, transform_indices = @transform_7, window_bounds = array<i64: 1, 32>}, {pipeline_mode = #tpu.pipeline_mode<synchronous>, transform_indices = @transform_8, window_bounds = array<i64: 4, 8, 32>}, {pipeline_mode = #tpu.pipeline_mode<synchronous>, transform_indices = @transform_9, window_bounds = array<i64: 1, 32>}, {transform_indices = @transform_10, window_bounds = array<i64: 4>}, {transform_indices = @transform_11, window_bounds = array<i64: 1, 8, 32>}, {transform_indices = @transform_12, window_bounds = array<i64: 1, 8, 32>}, {transform_indices = @transform_13, window_bounds = array<i64: 1, 1, 8, 8>}]} {
    %c0 = arith.constant 0 : index
    %c0_0 = arith.constant 0 : index
    %c0_1 = arith.constant 0 : index
    %0 = vector.load %arg2[%c0, %c0_0, %c0_1] : memref<1x8x32xbf16, #tpu.memory_space<vmem>>, vector<1x8x32xbf16>
    %1 = vector.shape_cast %0 : vector<1x8x32xbf16> to vector<8x32xbf16>
    %c0_2 = arith.constant 0 : index
    %c0_3 = arith.constant 0 : index
    %c0_4 = arith.constant 0 : index
    %2 = vector.load %arg3[%c0_2, %c0_3, %c0_4] : memref<1x8x32xbf16, #tpu.memory_space<vmem>>, vector<1x8x32xbf16>
    %3 = vector.shape_cast %2 : vector<1x8x32xbf16> to vector<8x32xbf16>
    %c0_5 = arith.constant 0 : index
    %4 = memref.load %arg12[%c0_5] : memref<4xf32, #tpu.memory_space<smem>>
    %c1 = arith.constant 1 : index
    %5 = memref.load %arg12[%c1] : memref<4xf32, #tpu.memory_space<smem>>
    %c2 = arith.constant 2 : index
    %6 = memref.load %arg12[%c2] : memref<4xf32, #tpu.memory_space<smem>>
    %c3 = arith.constant 3 : index
    %7 = memref.load %arg12[%c3] : memref<4xf32, #tpu.memory_space<smem>>
    %8 = arith.index_cast %arg1 : i32 to index
    %c0_6 = arith.constant 0 : index
    %c0_7 = arith.constant 0 : index
    %9 = vector.load %arg4[%8, %c0_6, %c0_7] : memref<4x32x24xbf16, #tpu.memory_space<vmem>>, vector<1x32x24xbf16>
    %10 = vector.shape_cast %9 : vector<1x32x24xbf16> to vector<32x24xbf16>
    %cst = arith.constant dense<0.000000e+00> : vector<8x24xf32>
    %11 = tpu.matmul %1, %10, %cst {dimension_numbers = #tpu.dot_dimension_numbers<[1], [0], [0], [1], [0, 0, 1, 1], [], []>} : vector<8x32xbf16>, vector<32x24xbf16>, vector<8x24xf32> -> vector<8x24xf32>
    %12 = arith.index_cast %arg1 : i32 to index
    %c0_8 = arith.constant 0 : index
    %c0_9 = arith.constant 0 : index
    %13 = vector.load %arg5[%12, %c0_8, %c0_9] : memref<4x1x24xf32, #tpu.memory_space<vmem>>, vector<1x1x24xf32>
    %14 = vector.shape_cast %13 : vector<1x1x24xf32> to vector<1x24xf32>
    %15 = vector.broadcast %14 : vector<1x24xf32> to vector<8x24xf32>
    %16 = arith.addf %11, %15 : vector<8x24xf32>
    %17 = arith.index_cast %arg1 : i32 to index
    %c0_10 = arith.constant 0 : index
    %c0_11 = arith.constant 0 : index
    %18 = vector.load %arg6[%17, %c0_10, %c0_11] : memref<4x32x24xbf16, #tpu.memory_space<vmem>>, vector<1x32x24xbf16>
    %19 = vector.shape_cast %18 : vector<1x32x24xbf16> to vector<32x24xbf16>
    %cst_12 = arith.constant dense<0.000000e+00> : vector<8x24xf32>
    %20 = tpu.matmul %3, %19, %cst_12 {dimension_numbers = #tpu.dot_dimension_numbers<[1], [0], [0], [1], [0, 0, 1, 1], [], []>} : vector<8x32xbf16>, vector<32x24xbf16>, vector<8x24xf32> -> vector<8x24xf32>
    %21 = arith.index_cast %arg1 : i32 to index
    %c0_13 = arith.constant 0 : index
    %c0_14 = arith.constant 0 : index
    %22 = vector.load %arg7[%21, %c0_13, %c0_14] : memref<4x1x24xf32, #tpu.memory_space<vmem>>, vector<1x1x24xf32>
    %23 = vector.shape_cast %22 : vector<1x1x24xf32> to vector<1x24xf32>
    %24 = vector.broadcast %23 : vector<1x24xf32> to vector<8x24xf32>
    %25 = arith.addf %20, %24 : vector<8x24xf32>
    %26 = vector.extract_strided_slice %16 {offsets = [0, 0], sizes = [8, 8], strides = [1, 1]} : vector<8x24xf32> to vector<8x8xf32>
    %27 = arith.truncf %26 : vector<8x8xf32> to vector<8x8xbf16>
    %28 = vector.extract_strided_slice %16 {offsets = [0, 8], sizes = [8, 8], strides = [1, 1]} : vector<8x24xf32> to vector<8x8xf32>
    %29 = arith.truncf %28 : vector<8x8xf32> to vector<8x8xbf16>
    %30 = vector.extract_strided_slice %16 {offsets = [0, 16], sizes = [8, 8], strides = [1, 1]} : vector<8x24xf32> to vector<8x8xf32>
    %31 = arith.truncf %30 : vector<8x8xf32> to vector<8x8xbf16>
    %32 = vector.extract_strided_slice %25 {offsets = [0, 0], sizes = [8, 8], strides = [1, 1]} : vector<8x24xf32> to vector<8x8xf32>
    %33 = arith.truncf %32 : vector<8x8xf32> to vector<8x8xbf16>
    %34 = vector.extract_strided_slice %25 {offsets = [0, 8], sizes = [8, 8], strides = [1, 1]} : vector<8x24xf32> to vector<8x8xf32>
    %35 = arith.truncf %34 : vector<8x8xf32> to vector<8x8xbf16>
    %36 = vector.extract_strided_slice %25 {offsets = [0, 16], sizes = [8, 8], strides = [1, 1]} : vector<8x24xf32> to vector<8x8xf32>
    %37 = arith.truncf %36 : vector<8x8xf32> to vector<8x8xbf16>
    %38 = tpu.concatenate %29, %35 in 0 : vector<8x8xbf16>, vector<8x8xbf16> -> vector<16x8xbf16>
    %cst_15 = arith.constant dense<0.000000e+00> : vector<8x16xf32>
    %39 = tpu.matmul %27, %38, %cst_15 {dimension_numbers = #tpu.dot_dimension_numbers<[1], [1], [0], [0], [0, 0, 1, 0], [], []>} : vector<8x8xbf16>, vector<16x8xbf16>, vector<8x16xf32> -> vector<8x16xf32>
    %cst_16 = arith.constant dense<0.000000e+00> : vector<8x16xf32>
    %40 = tpu.matmul %33, %38, %cst_16 {dimension_numbers = #tpu.dot_dimension_numbers<[1], [1], [0], [0], [0, 0, 1, 0], [], []>} : vector<8x8xbf16>, vector<16x8xbf16>, vector<8x16xf32> -> vector<8x16xf32>
    %41 = vector.extract_strided_slice %39 {offsets = [0, 0], sizes = [8, 8], strides = [1, 1]} : vector<8x16xf32> to vector<8x8xf32>
    %cst_17 = arith.constant dense<0xFF800000> : vector<8xf32>
    %42 = vector.multi_reduction <maximumf>, %41, %cst_17 [1] : vector<8x8xf32> to vector<8xf32>
    %43 = vector.shape_cast %42 : vector<8xf32> to vector<8x1xf32>
    %44 = vector.broadcast %43 : vector<8x1xf32> to vector<8x8xf32>
    %45 = arith.subf %41, %44 : vector<8x8xf32>
    %46 = arith.truncf %45 : vector<8x8xf32> to vector<8x8xbf16>
    %47 = math.exp %46 : vector<8x8xbf16>
    %48 = arith.extf %47 : vector<8x8xbf16> to vector<8x8xf32>
    %cst_18 = arith.constant dense<0.000000e+00> : vector<8xf32>
    %49 = vector.multi_reduction <add>, %48, %cst_18 [1] : vector<8x8xf32> to vector<8xf32>
    %50 = vector.shape_cast %49 : vector<8xf32> to vector<8x1xf32>
    %51 = vector.extract_strided_slice %39 {offsets = [0, 8], sizes = [8, 8], strides = [1, 1]} : vector<8x16xf32> to vector<8x8xf32>
    %cst_19 = arith.constant dense<0xFF800000> : vector<8xf32>
    %52 = vector.multi_reduction <maximumf>, %51, %cst_19 [1] : vector<8x8xf32> to vector<8xf32>
    %53 = vector.shape_cast %52 : vector<8xf32> to vector<8x1xf32>
    %54 = vector.broadcast %53 : vector<8x1xf32> to vector<8x8xf32>
    %55 = arith.subf %51, %54 : vector<8x8xf32>
    %56 = arith.truncf %55 : vector<8x8xf32> to vector<8x8xbf16>
    %57 = math.exp %56 : vector<8x8xbf16>
    %58 = arith.extf %57 : vector<8x8xbf16> to vector<8x8xf32>
    %cst_20 = arith.constant dense<0.000000e+00> : vector<8xf32>
    %59 = vector.multi_reduction <add>, %58, %cst_20 [1] : vector<8x8xf32> to vector<8xf32>
    %60 = vector.shape_cast %59 : vector<8xf32> to vector<8x1xf32>
    %61 = vector.extract_strided_slice %40 {offsets = [0, 0], sizes = [8, 8], strides = [1, 1]} : vector<8x16xf32> to vector<8x8xf32>
    %cst_21 = arith.constant dense<0xFF800000> : vector<8xf32>
    %62 = vector.multi_reduction <maximumf>, %61, %cst_21 [1] : vector<8x8xf32> to vector<8xf32>
    %63 = vector.shape_cast %62 : vector<8xf32> to vector<8x1xf32>
    %64 = vector.broadcast %63 : vector<8x1xf32> to vector<8x8xf32>
    %65 = arith.subf %61, %64 : vector<8x8xf32>
    %66 = arith.truncf %65 : vector<8x8xf32> to vector<8x8xbf16>
    %67 = math.exp %66 : vector<8x8xbf16>
    %68 = arith.extf %67 : vector<8x8xbf16> to vector<8x8xf32>
    %cst_22 = arith.constant dense<0.000000e+00> : vector<8xf32>
    %69 = vector.multi_reduction <add>, %68, %cst_22 [1] : vector<8x8xf32> to vector<8xf32>
    %70 = vector.shape_cast %69 : vector<8xf32> to vector<8x1xf32>
    %71 = vector.extract_strided_slice %40 {offsets = [0, 8], sizes = [8, 8], strides = [1, 1]} : vector<8x16xf32> to vector<8x8xf32>
    %cst_23 = arith.constant dense<0xFF800000> : vector<8xf32>
    %72 = vector.multi_reduction <maximumf>, %71, %cst_23 [1] : vector<8x8xf32> to vector<8xf32>
    %73 = vector.shape_cast %72 : vector<8xf32> to vector<8x1xf32>
    %74 = vector.broadcast %73 : vector<8x1xf32> to vector<8x8xf32>
    %75 = arith.subf %71, %74 : vector<8x8xf32>
    %76 = arith.truncf %75 : vector<8x8xf32> to vector<8x8xbf16>
    %77 = math.exp %76 : vector<8x8xbf16>
    %78 = arith.extf %77 : vector<8x8xbf16> to vector<8x8xf32>
    %cst_24 = arith.constant dense<0.000000e+00> : vector<8xf32>
    %79 = vector.multi_reduction <add>, %78, %cst_24 [1] : vector<8x8xf32> to vector<8xf32>
    %80 = vector.shape_cast %79 : vector<8xf32> to vector<8x1xf32>
    %cst_25 = arith.constant 1.000000e+00 : f32
    %81 = vector.broadcast %cst_25 : f32 to vector<8x1xf32>
    %82 = arith.divf %81, %70 : vector<8x1xf32>
    %83 = arith.extf %67 : vector<8x8xbf16> to vector<8x8xf32>
    %84 = vector.broadcast %82 : vector<8x1xf32> to vector<8x8xf32>
    %85 = arith.mulf %83, %84 : vector<8x8xf32>
    %86 = arith.truncf %85 : vector<8x8xf32> to vector<8x8xbf16>
    %c0_26 = arith.constant 0 : index
    %c0_27 = arith.constant 0 : index
    %c0_28 = arith.constant 0 : index
    %c0_29 = arith.constant 0 : index
    %87 = vector.load %arg15[%c0_26, %c0_27, %c0_28, %c0_29] : memref<1x1x8x8xbf16, #tpu.memory_space<vmem>>, vector<1x1x8x8xbf16>
    %88 = vector.shape_cast %87 : vector<1x1x8x8xbf16> to vector<8x8xbf16>
    %89 = vector.shape_cast %86 : vector<8x8xbf16> to vector<1x1x8x8xbf16>
    tpu.vector_store %arg15[%c0_26, %c0_27, %c0_28, %c0_29], %89 {strides = array<i32>} : memref<1x1x8x8xbf16, #tpu.memory_space<vmem>>, vector<1x1x8x8xbf16>,
    %90 = tpu.reciprocal %50 {approx = true} : vector<8x1xf32> -> vector<8x1xf32>
    %91 = tpu.reciprocal %60 {approx = true} : vector<8x1xf32> -> vector<8x1xf32>
    %92 = tpu.reciprocal %80 {approx = true} : vector<8x1xf32> -> vector<8x1xf32>
    %cst_30 = arith.constant dense<0.000000e+00> : vector<8x8xf32>
    %93 = tpu.matmul %47, %31, %cst_30 {dimension_numbers = #tpu.dot_dimension_numbers<[1], [0], [0], [1], [0, 0, 1, 1], [], []>} : vector<8x8xbf16>, vector<8x8xbf16>, vector<8x8xf32> -> vector<8x8xf32>
    %94 = vector.broadcast %4 : f32 to vector<8x1xf32>
    %95 = arith.mulf %94, %90 : vector<8x1xf32>
    %96 = vector.broadcast %95 : vector<8x1xf32> to vector<8x8xf32>
    %97 = arith.mulf %93, %96 : vector<8x8xf32>
    %cst_31 = arith.constant dense<0.000000e+00> : vector<8x8xf32>
    %98 = tpu.matmul %57, %37, %cst_31 {dimension_numbers = #tpu.dot_dimension_numbers<[1], [0], [0], [1], [0, 0, 1, 1], [], []>} : vector<8x8xbf16>, vector<8x8xbf16>, vector<8x8xf32> -> vector<8x8xf32>
    %99 = vector.broadcast %5 : f32 to vector<8x1xf32>
    %100 = arith.mulf %99, %91 : vector<8x1xf32>
    %101 = vector.broadcast %100 : vector<8x1xf32> to vector<8x8xf32>
    %102 = arith.mulf %98, %101 : vector<8x8xf32>
    %103 = arith.addf %97, %102 : vector<8x8xf32>
    %cst_32 = arith.constant dense<0.000000e+00> : vector<8x8xf32>
    %104 = tpu.matmul %77, %37, %cst_32 {dimension_numbers = #tpu.dot_dimension_numbers<[1], [0], [0], [1], [0, 0, 1, 1], [], []>} : vector<8x8xbf16>, vector<8x8xbf16>, vector<8x8xf32> -> vector<8x8xf32>
    %105 = vector.broadcast %6 : f32 to vector<8x1xf32>
    %106 = arith.mulf %105, %92 : vector<8x1xf32>
    %107 = vector.broadcast %106 : vector<8x1xf32> to vector<8x8xf32>
    %108 = arith.mulf %104, %107 : vector<8x8xf32>
    %cst_33 = arith.constant dense<0.000000e+00> : vector<8x8xf32>
    %109 = tpu.matmul %67, %31, %cst_33 {dimension_numbers = #tpu.dot_dimension_numbers<[1], [0], [0], [1], [0, 0, 1, 1], [], []>} : vector<8x8xbf16>, vector<8x8xbf16>, vector<8x8xf32> -> vector<8x8xf32>
    %110 = vector.broadcast %7 : f32 to vector<8x1xf32>
    %111 = arith.mulf %110, %82 : vector<8x1xf32>
    %112 = vector.broadcast %111 : vector<8x1xf32> to vector<8x8xf32>
    %113 = arith.mulf %109, %112 : vector<8x8xf32>
    %114 = arith.addf %108, %113 : vector<8x8xf32>
    %c0_i32 = arith.constant 0 : i32
    %115 = arith.cmpi eq, %arg1, %c0_i32 : i32
    %116 = arith.extui %115 : i1 to i32
    %c0_i32_34 = arith.constant 0 : i32
    %117 = arith.cmpi ne, %116, %c0_i32_34 : i32
    scf.if %117 {
      %140 = arith.addf %4, %5 : f32
      %c0_53 = arith.constant 0 : index
      %c0_54 = arith.constant 0 : index
      %141 = vector.load %arg9[%c0_53, %c0_54] : memref<1x32xf32, #tpu.memory_space<vmem>>, vector<1x32xf32>
      %142 = vector.broadcast %140 : f32 to vector<1x32xf32>
      %143 = arith.mulf %142, %141 : vector<1x32xf32>
      %144 = vector.shape_cast %143 : vector<1x32xf32> to vector<1x32xf32>
      %145 = vector.broadcast %144 : vector<1x32xf32> to vector<8x32xf32>
      %c0_55 = arith.constant 0 : index
      %c0_56 = arith.constant 0 : index
      %c0_57 = arith.constant 0 : index
      %146 = vector.load %arg13[%c0_55, %c0_56, %c0_57] : memref<1x8x32xf32, #tpu.memory_space<vmem>>, vector<1x8x32xf32>
      %147 = vector.shape_cast %146 : vector<1x8x32xf32> to vector<8x32xf32>
      %148 = vector.shape_cast %145 : vector<8x32xf32> to vector<1x8x32xf32>
      tpu.vector_store %arg13[%c0_55, %c0_56, %c0_57], %148 {strides = array<i32>} : memref<1x8x32xf32, #tpu.memory_space<vmem>>, vector<1x8x32xf32>,
      %149 = arith.addf %6, %7 : f32
      %c0_58 = arith.constant 0 : index
      %c0_59 = arith.constant 0 : index
      %150 = vector.load %arg11[%c0_58, %c0_59] : memref<1x32xf32, #tpu.memory_space<vmem>>, vector<1x32xf32>
      %151 = vector.broadcast %149 : f32 to vector<1x32xf32>
      %152 = arith.mulf %151, %150 : vector<1x32xf32>
      %153 = vector.shape_cast %152 : vector<1x32xf32> to vector<1x32xf32>
      %154 = vector.broadcast %153 : vector<1x32xf32> to vector<8x32xf32>
      %c0_60 = arith.constant 0 : index
      %c0_61 = arith.constant 0 : index
      %c0_62 = arith.constant 0 : index
      %155 = vector.load %arg14[%c0_60, %c0_61, %c0_62] : memref<1x8x32xf32, #tpu.memory_space<vmem>>, vector<1x8x32xf32>
      %156 = vector.shape_cast %155 : vector<1x8x32xf32> to vector<8x32xf32>
      %157 = vector.shape_cast %154 : vector<8x32xf32> to vector<1x8x32xf32>
      tpu.vector_store %arg14[%c0_60, %c0_61, %c0_62], %157 {strides = array<i32>} : memref<1x8x32xf32, #tpu.memory_space<vmem>>, vector<1x8x32xf32>,
    } else {
    }
    %c0_35 = arith.constant 0 : index
    %c0_36 = arith.constant 0 : index
    %c0_37 = arith.constant 0 : index
    %118 = vector.load %arg13[%c0_35, %c0_36, %c0_37] : memref<1x8x32xf32, #tpu.memory_space<vmem>>, vector<1x8x32xf32>
    %119 = vector.shape_cast %118 : vector<1x8x32xf32> to vector<8x32xf32>
    %120 = arith.truncf %103 : vector<8x8xf32> to vector<8x8xbf16>
    %121 = arith.index_cast %arg1 : i32 to index
    %c0_38 = arith.constant 0 : index
    %c0_39 = arith.constant 0 : index
    %122 = vector.load %arg8[%121, %c0_38, %c0_39] : memref<4x8x32xbf16, #tpu.memory_space<vmem>>, vector<1x8x32xbf16>
    %123 = vector.shape_cast %122 : vector<1x8x32xbf16> to vector<8x32xbf16>
    %cst_40 = arith.constant dense<0.000000e+00> : vector<8x32xf32>
    %124 = tpu.matmul %120, %123, %cst_40 {dimension_numbers = #tpu.dot_dimension_numbers<[1], [0], [0], [1], [0, 0, 1, 1], [], []>} : vector<8x8xbf16>, vector<8x32xbf16>, vector<8x32xf32> -> vector<8x32xf32>
    %125 = arith.addf %119, %124 : vector<8x32xf32>
    %c0_41 = arith.constant 0 : index
    %c0_42 = arith.constant 0 : index
    %c0_43 = arith.constant 0 : index
    %126 = vector.load %arg13[%c0_41, %c0_42, %c0_43] : memref<1x8x32xf32, #tpu.memory_space<vmem>>, vector<1x8x32xf32>
    %127 = vector.shape_cast %126 : vector<1x8x32xf32> to vector<8x32xf32>
    %128 = vector.shape_cast %125 : vector<8x32xf32> to vector<1x8x32xf32>
    tpu.vector_store %arg13[%c0_41, %c0_42, %c0_43], %128 {strides = array<i32>} : memref<1x8x32xf32, #tpu.memory_space<vmem>>, vector<1x8x32xf32>,
    %c0_44 = arith.constant 0 : index
    %c0_45 = arith.constant 0 : index
    %c0_46 = arith.constant 0 : index
    %129 = vector.load %arg14[%c0_44, %c0_45, %c0_46] : memref<1x8x32xf32, #tpu.memory_space<vmem>>, vector<1x8x32xf32>
    %130 = vector.shape_cast %129 : vector<1x8x32xf32> to vector<8x32xf32>
    %131 = arith.truncf %114 : vector<8x8xf32> to vector<8x8xbf16>
    %132 = arith.index_cast %arg1 : i32 to index
    %c0_47 = arith.constant 0 : index
    %c0_48 = arith.constant 0 : index
    %133 = vector.load %arg10[%132, %c0_47, %c0_48] : memref<4x8x32xbf16, #tpu.memory_space<vmem>>, vector<1x8x32xbf16>
    %134 = vector.shape_cast %133 : vector<1x8x32xbf16> to vector<8x32xbf16>
    %cst_49 = arith.constant dense<0.000000e+00> : vector<8x32xf32>
    %135 = tpu.matmul %131, %134, %cst_49 {dimension_numbers = #tpu.dot_dimension_numbers<[1], [0], [0], [1], [0, 0, 1, 1], [], []>} : vector<8x8xbf16>, vector<8x32xbf16>, vector<8x32xf32> -> vector<8x32xf32>
    %136 = arith.addf %130, %135 : vector<8x32xf32>
    %c0_50 = arith.constant 0 : index
    %c0_51 = arith.constant 0 : index
    %c0_52 = arith.constant 0 : index
    %137 = vector.load %arg14[%c0_50, %c0_51, %c0_52] : memref<1x8x32xf32, #tpu.memory_space<vmem>>, vector<1x8x32xf32>
    %138 = vector.shape_cast %137 : vector<1x8x32xf32> to vector<8x32xf32>
    %139 = vector.shape_cast %136 : vector<8x32xf32> to vector<1x8x32xf32>
    tpu.vector_store %arg14[%c0_50, %c0_51, %c0_52], %139 {strides = array<i32>} : memref<1x8x32xf32, #tpu.memory_space<vmem>>, vector<1x8x32xf32>,
    return
  }
  func.func @transform_0(%arg0: i32, %arg1: i32) -> (i32, i32, i32) {
    %c0_i32 = arith.constant 0 : i32
    %c0_i32_0 = arith.constant 0 : i32
    %c0_i32_1 = arith.constant 0 : i32
    return %arg0, %c0_i32, %c0_i32_0 : i32, i32, i32
  }
  func.func @transform_1(%arg0: i32, %arg1: i32) -> (i32, i32, i32) {
    %c0_i32 = arith.constant 0 : i32
    %c0_i32_0 = arith.constant 0 : i32
    %c0_i32_1 = arith.constant 0 : i32
    return %arg0, %c0_i32, %c0_i32_0 : i32, i32, i32
  }
  func.func @transform_2(%arg0: i32, %arg1: i32) -> (i32, i32, i32) {
    %c0_i32 = arith.constant 0 : i32
    %c0_i32_0 = arith.constant 0 : i32
    %c0_i32_1 = arith.constant 0 : i32
    %c0_i32_2 = arith.constant 0 : i32
    return %c0_i32, %c0_i32_0, %c0_i32_1 : i32, i32, i32
  }
  func.func @transform_3(%arg0: i32, %arg1: i32) -> (i32, i32, i32) {
    %c0_i32 = arith.constant 0 : i32
    %c0_i32_0 = arith.constant 0 : i32
    %c0_i32_1 = arith.constant 0 : i32
    %c0_i32_2 = arith.constant 0 : i32
    return %c0_i32, %c0_i32_0, %c0_i32_1 : i32, i32, i32
  }
  func.func @transform_4(%arg0: i32, %arg1: i32) -> (i32, i32, i32) {
    %c0_i32 = arith.constant 0 : i32
    %c0_i32_0 = arith.constant 0 : i32
    %c0_i32_1 = arith.constant 0 : i32
    %c0_i32_2 = arith.constant 0 : i32
    return %c0_i32, %c0_i32_0, %c0_i32_1 : i32, i32, i32
  }
  func.func @transform_5(%arg0: i32, %arg1: i32) -> (i32, i32, i32) {
    %c0_i32 = arith.constant 0 : i32
    %c0_i32_0 = arith.constant 0 : i32
    %c0_i32_1 = arith.constant 0 : i32
    %c0_i32_2 = arith.constant 0 : i32
    return %c0_i32, %c0_i32_0, %c0_i32_1 : i32, i32, i32
  }
  func.func @transform_6(%arg0: i32, %arg1: i32) -> (i32, i32, i32) {
    %c0_i32 = arith.constant 0 : i32
    %c0_i32_0 = arith.constant 0 : i32
    %c0_i32_1 = arith.constant 0 : i32
    %c0_i32_2 = arith.constant 0 : i32
    return %c0_i32, %c0_i32_0, %c0_i32_1 : i32, i32, i32
  }
  func.func @transform_7(%arg0: i32, %arg1: i32) -> (i32, i32) {
    %c0_i32 = arith.constant 0 : i32
    %c0_i32_0 = arith.constant 0 : i32
    %c0_i32_1 = arith.constant 0 : i32
    return %c0_i32, %c0_i32_0 : i32, i32
  }
  func.func @transform_8(%arg0: i32, %arg1: i32) -> (i32, i32, i32) {
    %c0_i32 = arith.constant 0 : i32
    %c0_i32_0 = arith.constant 0 : i32
    %c0_i32_1 = arith.constant 0 : i32
    %c0_i32_2 = arith.constant 0 : i32
    return %c0_i32, %c0_i32_0, %c0_i32_1 : i32, i32, i32
  }
  func.func @transform_9(%arg0: i32, %arg1: i32) -> (i32, i32) {
    %c0_i32 = arith.constant 0 : i32
    %c0_i32_0 = arith.constant 0 : i32
    %c0_i32_1 = arith.constant 0 : i32
    return %c0_i32, %c0_i32_0 : i32, i32
  }
  func.func @transform_10(%arg0: i32, %arg1: i32) -> i32 {
    %c0_i32 = arith.constant 0 : i32
    %c0_i32_0 = arith.constant 0 : i32
    return %c0_i32 : i32
  }
  func.func @transform_11(%arg0: i32, %arg1: i32) -> (i32, i32, i32) {
    %c0_i32 = arith.constant 0 : i32
    %c0_i32_0 = arith.constant 0 : i32
    %c0_i32_1 = arith.constant 0 : i32
    return %arg0, %c0_i32, %c0_i32_0 : i32, i32, i32
  }
  func.func @transform_12(%arg0: i32, %arg1: i32) -> (i32, i32, i32) {
    %c0_i32 = arith.constant 0 : i32
    %c0_i32_0 = arith.constant 0 : i32
    %c0_i32_1 = arith.constant 0 : i32
    return %arg0, %c0_i32, %c0_i32_0 : i32, i32, i32
  }
  func.func @transform_13(%arg0: i32, %arg1: i32) -> (i32, i32, i32, i32) {
    %c0_i32 = arith.constant 0 : i32
    %c0_i32_0 = arith.constant 0 : i32
    %c0_i32_1 = arith.constant 0 : i32
    return %arg0, %arg1, %c0_i32, %c0_i32_0 : i32, i32, i32, i32
  }
}

</mosaic_0001>

<llo_original>
// kernel: tpu_custom_call.1
$region0: #{tpu_custom_call.1}
  #allocation0 [shape = 'u32[]', space=smem, size = 0x4, offset = 0x4, fixed_abs, tag = 'smem constant byte address 0x4 - core index']
  #allocation1 [shape = 'u32[144,128]{1,0:T(1,128)}', space=vmem, size = 0x12000, scoped, tag = 'internal scratch']
  %s0 = inlined_call_operand.vmem [shape: bf16[2,8,32], index: 0, kind: input, shape index: {}]
  %s1 = inlined_call_operand.vmem [shape: bf16[2,8,32], index: 1, kind: input, shape index: {}]
  %s2 = inlined_call_operand.vmem [shape: bf16[4,32,24], index: 2, kind: input, shape index: {}]
  %s3 = inlined_call_operand.vmem [shape: f32[4,1,24], index: 3, kind: input, shape index: {}]
  %s4 = inlined_call_operand.vmem [shape: bf16[4,32,24], index: 4, kind: input, shape index: {}]
  %s5 = inlined_call_operand.vmem [shape: f32[4,1,24], index: 5, kind: input, shape index: {}]
  %s6 = inlined_call_operand.vmem [shape: bf16[4,8,32], index: 6, kind: input, shape index: {}]
  %s7 = inlined_call_operand.vmem [shape: f32[1,32], index: 7, kind: input, shape index: {}]
  %s8 = inlined_call_operand.vmem [shape: bf16[4,8,32], index: 8, kind: input, shape index: {}]
  %s9 = inlined_call_operand.vmem [shape: f32[1,32], index: 9, kind: input, shape index: {}]
  %s10 = inlined_call_operand.vmem [shape: f32[4], index: 10, kind: input, shape index: {}]
  %s11 = inlined_call_operand.hbm [shape: f32[2,8,32], index: 11, kind: output, shape index: {0}]
  %s12 = inlined_call_operand.hbm [shape: f32[2,8,32], index: 12, kind: output, shape index: {1}]
  %s13 = inlined_call_operand.hbm [shape: bf16[2,4,8,8], index: 13, kind: output, shape index: {2}]
  %14 = xla_tuple %s11, %s12, %s13
  %s15 = sld [smem:[#allocation0]]
  $region101: #{tpu_custom_call.1} parent=0
    _
  %s17 = ssub.s32 1, %s15
  %s18 = scalar_select 0, %s17, %s15
  $region1: #{tpu_custom_call.1} parent=0
    #allocation2 [shape = 'u8[512]{0}', space=smem, size = 0x200, scoped, tag = 'input window, operand 10, single buffered']
    #allocation3 [shape = 's32[2]{0}', space=sflag, size = 0x8, scoped, tag = 'scoped memory for tpu_custom_call.1']
    #allocation4 [shape = 's32[2]{0}', space=sflag, size = 0x8, scoped, tag = 'scoped memory for tpu_custom_call.1']
    #allocation5 [shape = 'u8[8192]{0}', space=vmem, size = 0x2000, scoped, tag = 'output window, operand 0']
    #allocation6 [shape = 'u8[8192]{0}', space=vmem, size = 0x2000, scoped, tag = 'output window, operand 1']
    #allocation7 [shape = 's32[2]{0}', space=sflag, size = 0x8, scoped, tag = 'scoped memory for tpu_custom_call.1']
    #allocation8 [shape = 'u8[4096]{0}', space=vmem, size = 0x1000, scoped, tag = 'output window, operand 2']
    %19 = vsyncpa [#allocation4], 0
    %20 = vsyncpa [#allocation3], 0
    %s21 = scalar_lea.sflag [#allocation3], 1
    %22 = vsyncpa %s21, 0
    %23 = vsyncpa [#allocation7], 0
    %s24 = scalar_lea.sflag [#allocation7], 1
    %25 = vsyncpa %s24, 0
    loop: start=0, step=1, limit=10
    $region2: #{tpu_custom_call.1} parent=1 // loop_pre_header
      _
    $region3: #{tpu_custom_call.1} parent=1 // loop_header
      %s27 = sphi 0, %s31
      %p28 = scmp.ge.s32.totalorder %s27, 10
      %s34 = sphi 0, %s46
      %s35 = sphi 0, %s42
      %s36 = sphi 0, %s34
      %s37 = sphi 0, %s35
      %s38 = sphi 0, %s36
      %s39 = sphi 0, %s37
      %s49 = sphi 0, %s51
      %s52 = sphi 0, %s49
      %s53 = sphi 0, %s52
      %s69 = sphi 0, %s53
      %s75 = sphi 0, %s77
      %s78 = sphi 0, %s75
      %s79 = sphi 0, %s78
      %s95 = sphi 0, %s79
      %s99 = sphi 0, %s99
      %s101 = sphi 0, %s99
      %s102 = sphi 0, %s101
      %s116 = sphi 0, %s102
      %s120 = sphi 0, %s120
      %s122 = sphi 0, %s120
      %s123 = sphi 0, %s122
      %s137 = sphi 0, %s123
      %s141 = sphi 0, %s141
      %s143 = sphi 0, %s141
      %s144 = sphi 0, %s143
      %s158 = sphi 0, %s144
      %s162 = sphi 0, %s162
      %s164 = sphi 0, %s162
      %s165 = sphi 0, %s164
      %s179 = sphi 0, %s165
      %s183 = sphi 0, %s183
      %s185 = sphi 0, %s183
      %s186 = sphi 0, %s185
      %s200 = sphi 0, %s186
      %s204 = sphi 0, %s204
      %s206 = sphi 0, %s204
      %s207 = sphi 0, %s206
      %s221 = sphi 0, %s207
      %s225 = sphi 0, %s225
      %s227 = sphi 0, %s225
      %s228 = sphi 0, %s227
      %s242 = sphi 0, %s228
      %s246 = sphi 0, %s246
      %s248 = sphi 0, %s246
      %s249 = sphi 0, %s248
      %s263 = sphi 0, %s249
      %s267 = sphi 0, %s267
      %s269 = sphi 0, %s267
      %s270 = sphi 0, %s269
      %s284 = sphi 0, %s270
      %s290 = sphi 0, %s292
      %s293 = sphi 0, %s290
      %s294 = sphi 0, %s293
      %s310 = sphi 0, %s294
      %s316 = sphi 0, %s318
      %s319 = sphi 0, %s316
      %s320 = sphi 0, %s319
      %s336 = sphi 0, %s320
      %s344 = sphi 0, %s346
      %s347 = sphi 0, %s344
      %s348 = sphi 0, %s347
      %s364 = sphi 0, %s348
    $region4: #{tpu_custom_call.1} parent=1 // loop_header_branch
      %30 = sbr.rel (%p28) target = $region8
    $region5: #{tpu_custom_call.1} parent=1 // loop_body
      %s32 = ssub.s32 %s27, 1
      %s33 = ssub.s32 %s27, 2
      %s40 = sadd.s32 1, %s35
      %p41 = scmp.ge.s32.totalorder %s40, 4
      %s42 = scalar_select %p41, 0, %s40
      %s43 = sadd.s32 1, %s34
      %s44 = scalar_select %p41, %s43, %s34
      %p45 = scmp.ge.s32.totalorder %s44, 2
      %s46 = scalar_select %p45, 0, %s44
      %s47 = ssub.s32 %s34, %s46
      %p48 = scmp.eq.s32.totalorder %s47, 0
      %s50 = sadd.s32 %s49, 1
      %s51 = scalar_select %p48, %s49, %s50
      %p54 = pneg %p48
      %p55 = scmp.eq.s32.totalorder %s27, 7
      %p56 = por %p54, %p55
      %p57 = scmp.ne.s32.totalorder %s49, %s52
      %p58 = scmp.eq.s32.totalorder %s27, 0
      %p59 = por %p57, %p58
      %p60 = scmp.ne.s32.totalorder %s49, %s52
      %p61 = scmp.eq.s32.totalorder %s32, 7
      %p62 = por %p60, %p61
      %p63 = scmp.ne.s32.totalorder %s52, %s53
      %p64 = scmp.eq.s32.totalorder %s32, 0
      %p65 = por %p63, %p64
      %p66 = scmp.ne.s32.totalorder %s52, %s53
      %p67 = scmp.eq.s32.totalorder %s33, 7
      %p68 = por %p66, %p67
      %p70 = scmp.ne.s32.totalorder %s53, %s69
      %p71 = scmp.eq.s32.totalorder %s33, 0
      %p72 = por %p70, %p71
      %s73 = ssub.s32 %s34, %s46
      %p74 = scmp.eq.s32.totalorder %s73, 0
      %s76 = sadd.s32 %s75, 1
      %s77 = scalar_select %p74, %s75, %s76
      %p80 = pneg %p74
      %p81 = scmp.eq.s32.totalorder %s27, 7
      %p82 = por %p80, %p81
      %p83 = scmp.ne.s32.totalorder %s75, %s78
      %p84 = scmp.eq.s32.totalorder %s27, 0
      %p85 = por %p83, %p84
      %p86 = scmp.ne.s32.totalorder %s75, %s78
      %p87 = scmp.eq.s32.totalorder %s32, 7
      %p88 = por %p86, %p87
      %p89 = scmp.ne.s32.totalorder %s78, %s79
      %p90 = scmp.eq.s32.totalorder %s32, 0
      %p91 = por %p89, %p90
      %p92 = scmp.ne.s32.totalorder %s78, %s79
      %p93 = scmp.eq.s32.totalorder %s33, 7
      %p94 = por %p92, %p93
      %p96 = scmp.ne.s32.totalorder %s79, %s95
      %p97 = scmp.eq.s32.totalorder %s33, 0
      %p98 = por %p96, %p97
      %s100 = sadd.s32 %s99, 1
      %p103 = scmp.eq.s32.totalorder %s27, 7
      %p104 = scmp.ne.s32.totalorder %s99, %s101
      %p105 = scmp.eq.s32.totalorder %s27, 0
      %p106 = por %p104, %p105
      %p107 = scmp.ne.s32.totalorder %s99, %s101
      %p108 = scmp.eq.s32.totalorder %s32, 7
      %p109 = por %p107, %p108
      %p110 = scmp.ne.s32.totalorder %s101, %s102
      %p111 = scmp.eq.s32.totalorder %s32, 0
      %p112 = por %p110, %p111
      %p113 = scmp.ne.s32.totalorder %s101, %s102
      %p114 = scmp.eq.s32.totalorder %s33, 7
      %p115 = por %p113, %p114
      %p117 = scmp.ne.s32.totalorder %s102, %s116
      %p118 = scmp.eq.s32.totalorder %s33, 0
      %p119 = por %p117, %p118
      %s121 = sadd.s32 %s120, 1
      %p124 = scmp.eq.s32.totalorder %s27, 7
      %p125 = scmp.ne.s32.totalorder %s120, %s122
      %p126 = scmp.eq.s32.totalorder %s27, 0
      %p127 = por %p125, %p126
      %p128 = scmp.ne.s32.totalorder %s120, %s122
      %p129 = scmp.eq.s32.totalorder %s32, 7
      %p130 = por %p128, %p129
      %p131 = scmp.ne.s32.totalorder %s122, %s123
      %p132 = scmp.eq.s32.totalorder %s32, 0
      %p133 = por %p131, %p132
      %p134 = scmp.ne.s32.totalorder %s122, %s123
      %p135 = scmp.eq.s32.totalorder %s33, 7
      %p136 = por %p134, %p135
      %p138 = scmp.ne.s32.totalorder %s123, %s137
      %p139 = scmp.eq.s32.totalorder %s33, 0
      %p140 = por %p138, %p139
      %s142 = sadd.s32 %s141, 1
      %p145 = scmp.eq.s32.totalorder %s27, 7
      %p146 = scmp.ne.s32.totalorder %s141, %s143
      %p147 = scmp.eq.s32.totalorder %s27, 0
      %p148 = por %p146, %p147
      %p149 = scmp.ne.s32.totalorder %s141, %s143
      %p150 = scmp.eq.s32.totalorder %s32, 7
      %p151 = por %p149, %p150
      %p152 = scmp.ne.s32.totalorder %s143, %s144
      %p153 = scmp.eq.s32.totalorder %s32, 0
      %p154 = por %p152, %p153
      %p155 = scmp.ne.s32.totalorder %s143, %s144
      %p156 = scmp.eq.s32.totalorder %s33, 7
      %p157 = por %p155, %p156
      %p159 = scmp.ne.s32.totalorder %s144, %s158
      %p160 = scmp.eq.s32.totalorder %s33, 0
      %p161 = por %p159, %p160
      %s163 = sadd.s32 %s162, 1
      %p166 = scmp.eq.s32.totalorder %s27, 7
      %p167 = scmp.ne.s32.totalorder %s162, %s164
      %p168 = scmp.eq.s32.totalorder %s27, 0
      %p169 = por %p167, %p168
      %p170 = scmp.ne.s32.totalorder %s162, %s164
      %p171 = scmp.eq.s32.totalorder %s32, 7
      %p172 = por %p170, %p171
      %p173 = scmp.ne.s32.totalorder %s164, %s165
      %p174 = scmp.eq.s32.totalorder %s32, 0
      %p175 = por %p173, %p174
      %p176 = scmp.ne.s32.totalorder %s164, %s165
      %p177 = scmp.eq.s32.totalorder %s33, 7
      %p178 = por %p176, %p177
      %p180 = scmp.ne.s32.totalorder %s165, %s179
      %p181 = scmp.eq.s32.totalorder %s33, 0
      %p182 = por %p180, %p181
      %s184 = sadd.s32 %s183, 1
      %p187 = scmp.eq.s32.totalorder %s27, 7
      %p188 = scmp.ne.s32.totalorder %s183, %s185
      %p189 = scmp.eq.s32.totalorder %s27, 0
      %p190 = por %p188, %p189
      %p191 = scmp.ne.s32.totalorder %s183, %s185
      %p192 = scmp.eq.s32.totalorder %s32, 7
      %p193 = por %p191, %p192
      %p194 = scmp.ne.s32.totalorder %s185, %s186
      %p195 = scmp.eq.s32.totalorder %s32, 0
      %p196 = por %p194, %p195
      %p197 = scmp.ne.s32.totalorder %s185, %s186
      %p198 = scmp.eq.s32.totalorder %s33, 7
      %p199 = por %p197, %p198
      %p201 = scmp.ne.s32.totalorder %s186, %s200
      %p202 = scmp.eq.s32.totalorder %s33, 0
      %p203 = por %p201, %p202
      %s205 = sadd.s32 %s204, 1
      %p208 = scmp.eq.s32.totalorder %s27, 7
      %p209 = scmp.ne.s32.totalorder %s204, %s206
      %p210 = scmp.eq.s32.totalorder %s27, 0
      %p211 = por %p209, %p210
      %p212 = scmp.ne.s32.totalorder %s204, %s206
      %p213 = scmp.eq.s32.totalorder %s32, 7
      %p214 = por %p212, %p213
      %p215 = scmp.ne.s32.totalorder %s206, %s207
      %p216 = scmp.eq.s32.totalorder %s32, 0
      %p217 = por %p215, %p216
      %p218 = scmp.ne.s32.totalorder %s206, %s207
      %p219 = scmp.eq.s32.totalorder %s33, 7
      %p220 = por %p218, %p219
      %p222 = scmp.ne.s32.totalorder %s207, %s221
      %p223 = scmp.eq.s32.totalorder %s33, 0
      %p224 = por %p222, %p223
      %s226 = sadd.s32 %s225, 1
      %p229 = scmp.eq.s32.totalorder %s27, 7
      %p230 = scmp.ne.s32.totalorder %s225, %s227
      %p231 = scmp.eq.s32.totalorder %s27, 0
      %p232 = por %p230, %p231
      %p233 = scmp.ne.s32.totalorder %s225, %s227
      %p234 = scmp.eq.s32.totalorder %s32, 7
      %p235 = por %p233, %p234
      %p236 = scmp.ne.s32.totalorder %s227, %s228
      %p237 = scmp.eq.s32.totalorder %s32, 0
      %p238 = por %p236, %p237
      %p239 = scmp.ne.s32.totalorder %s227, %s228
      %p240 = scmp.eq.s32.totalorder %s33, 7
      %p241 = por %p239, %p240
      %p243 = scmp.ne.s32.totalorder %s228, %s242
      %p244 = scmp.eq.s32.totalorder %s33, 0
      %p245 = por %p243, %p244
      %s247 = sadd.s32 %s246, 1
      %p250 = scmp.eq.s32.totalorder %s27, 7
      %p251 = scmp.ne.s32.totalorder %s246, %s248
      %p252 = scmp.eq.s32.totalorder %s27, 0
      %p253 = por %p251, %p252
      %p254 = scmp.ne.s32.totalorder %s246, %s248
      %p255 = scmp.eq.s32.totalorder %s32, 7
      %p256 = por %p254, %p255
      %p257 = scmp.ne.s32.totalorder %s248, %s249
      %p258 = scmp.eq.s32.totalorder %s32, 0
      %p259 = por %p257, %p258
      %p260 = scmp.ne.s32.totalorder %s248, %s249
      %p261 = scmp.eq.s32.totalorder %s33, 7
      %p262 = por %p260, %p261
      %p264 = scmp.ne.s32.totalorder %s249, %s263
      %p265 = scmp.eq.s32.totalorder %s33, 0
      %p266 = por %p264, %p265
      %s268 = sadd.s32 %s267, 1
      %p271 = scmp.eq.s32.totalorder %s27, 7
      %p272 = scmp.ne.s32.totalorder %s267, %s269
      %p273 = scmp.eq.s32.totalorder %s27, 0
      %p274 = por %p272, %p273
      %p275 = scmp.ne.s32.totalorder %s267, %s269
      %p276 = scmp.eq.s32.totalorder %s32, 7
      %p277 = por %p275, %p276
      %p278 = scmp.ne.s32.totalorder %s269, %s270
      %p279 = scmp.eq.s32.totalorder %s32, 0
      %p280 = por %p278, %p279
      %p281 = scmp.ne.s32.totalorder %s269, %s270
      %p282 = scmp.eq.s32.totalorder %s33, 7
      %p283 = por %p281, %p282
      %p285 = scmp.ne.s32.totalorder %s270, %s284
      %p286 = scmp.eq.s32.totalorder %s33, 0
      %p287 = por %p285, %p286
      %s288 = ssub.s32 %s34, %s46
      %p289 = scmp.eq.s32.totalorder %s288, 0
      %s291 = sadd.s32 %s290, 1
      %s292 = scalar_select %p289, %s290, %s291
      %p295 = pneg %p289
      %p296 = scmp.eq.s32.totalorder %s27, 7
      %p297 = por %p295, %p296
      %p298 = scmp.ne.s32.totalorder %s290, %s293
      %p299 = scmp.eq.s32.totalorder %s27, 0
      %p300 = por %p298, %p299
      %p301 = scmp.ne.s32.totalorder %s290, %s293
      %p302 = scmp.eq.s32.totalorder %s32, 7
      %p303 = por %p301, %p302
      %p304 = scmp.ne.s32.totalorder %s293, %s294
      %p305 = scmp.eq.s32.totalorder %s32, 0
      %p306 = por %p304, %p305
      %p307 = scmp.ne.s32.totalorder %s293, %s294
      %p308 = scmp.eq.s32.totalorder %s33, 7
      %p309 = por %p307, %p308
      %p311 = scmp.ne.s32.totalorder %s294, %s310
      %p312 = scmp.eq.s32.totalorder %s33, 0
      %p313 = por %p311, %p312
      %s314 = ssub.s32 %s34, %s46
      %p315 = scmp.eq.s32.totalorder %s314, 0
      %s317 = sadd.s32 %s316, 1
      %s318 = scalar_select %p315, %s316, %s317
      %p321 = pneg %p315
      %p322 = scmp.eq.s32.totalorder %s27, 7
      %p323 = por %p321, %p322
      %p324 = scmp.ne.s32.totalorder %s316, %s319
      %p325 = scmp.eq.s32.totalorder %s27, 0
      %p326 = por %p324, %p325
      %p327 = scmp.ne.s32.totalorder %s316, %s319
      %p328 = scmp.eq.s32.totalorder %s32, 7
      %p329 = por %p327, %p328
      %p330 = scmp.ne.s32.totalorder %s319, %s320
      %p331 = scmp.eq.s32.totalorder %s32, 0
      %p332 = por %p330, %p331
      %p333 = scmp.ne.s32.totalorder %s319, %s320
      %p334 = scmp.eq.s32.totalorder %s33, 7
      %p335 = por %p333, %p334
      %p337 = scmp.ne.s32.totalorder %s320, %s336
      %p338 = scmp.eq.s32.totalorder %s33, 0
      %p339 = por %p337, %p338
      %s340 = ssub.s32 %s34, %s46
      %s341 = ssub.s32 %s35, %s42
      %s342 = sor.u32 %s340, %s341
      %p343 = scmp.eq.s32.totalorder %s342, 0
      %s345 = sadd.s32 %s344, 1
      %s346 = scalar_select %p343, %s344, %s345
      %p349 = pneg %p343
      %p350 = scmp.eq.s32.totalorder %s27, 7
      %p351 = por %p349, %p350
      %p352 = scmp.ne.s32.totalorder %s344, %s347
      %p353 = scmp.eq.s32.totalorder %s27, 0
      %p354 = por %p352, %p353
      %p355 = scmp.ne.s32.totalorder %s344, %s347
      %p356 = scmp.eq.s32.totalorder %s32, 7
      %p357 = por %p355, %p356
      %p358 = scmp.ne.s32.totalorder %s347, %s348
      %p359 = scmp.eq.s32.totalorder %s32, 0
      %p360 = por %p358, %p359
      %p361 = scmp.ne.s32.totalorder %s347, %s348
      %p362 = scmp.eq.s32.totalorder %s33, 7
      %p363 = por %p361, %p362
      %p365 = scmp.ne.s32.totalorder %s348, %s364
      %p366 = scmp.eq.s32.totalorder %s33, 0
      %p367 = por %p365, %p366
      %p368 = scmp.le.s32.totalorder 1, %s27
      %p369 = scmp.lt.s32.totalorder %s27, 9
      %p370 = pnand %p368, %p369
      %p371 = pneg %p370
      // Predicated region
      $region9: #{tpu_custom_call.1} parent=5 // pred_check
        _
      $region10: #{tpu_custom_call.1} parent=5 // pred_check_branch
        %373 = sbr.rel (%p370) target = $region12
      $region11: #{tpu_custom_call.1} parent=5 // pred_region
        %s374 = ssub.s32 %s27, 1
        // Predicated region
        $region13: #{tpu_custom_call.1} parent=11 // pred_check
          %p375 = pneg %p112
        $region14: #{tpu_custom_call.1} parent=11 // pred_check_branch
          %377 = sbr.rel (%p375) target = $region16
        $region15: #{tpu_custom_call.1} parent=11 // pred_region
          _
        $region16: #{tpu_custom_call.1} parent=11 // pred_fallthru
          _
        // Predicated region
        $region17: #{tpu_custom_call.1} parent=11 // pred_check
          %p378 = pneg %p133
        $region18: #{tpu_custom_call.1} parent=11 // pred_check_branch
          %380 = sbr.rel (%p378) target = $region20
        $region19: #{tpu_custom_call.1} parent=11 // pred_region
          _
        $region20: #{tpu_custom_call.1} parent=11 // pred_fallthru
          _
        // Predicated region
        $region21: #{tpu_custom_call.1} parent=11 // pred_check
          %p381 = pneg %p154
        $region22: #{tpu_custom_call.1} parent=11 // pred_check_branch
          %383 = sbr.rel (%p381) target = $region24
        $region23: #{tpu_custom_call.1} parent=11 // pred_region
          _
        $region24: #{tpu_custom_call.1} parent=11 // pred_fallthru
          _
        // Predicated region
        $region25: #{tpu_custom_call.1} parent=11 // pred_check
          %p384 = pneg %p175
        $region26: #{tpu_custom_call.1} parent=11 // pred_check_branch
          %386 = sbr.rel (%p384) target = $region28
        $region27: #{tpu_custom_call.1} parent=11 // pred_region
          _
        $region28: #{tpu_custom_call.1} parent=11 // pred_fallthru
          _
        // Predicated region
        $region29: #{tpu_custom_call.1} parent=11 // pred_check
          %p387 = pneg %p196
        $region30: #{tpu_custom_call.1} parent=11 // pred_check_branch
          %389 = sbr.rel (%p387) target = $region32
        $region31: #{tpu_custom_call.1} parent=11 // pred_region
          _
        $region32: #{tpu_custom_call.1} parent=11 // pred_fallthru
          _
        // Predicated region
        $region33: #{tpu_custom_call.1} parent=11 // pred_check
          %p390 = pneg %p217
        $region34: #{tpu_custom_call.1} parent=11 // pred_check_branch
          %392 = sbr.rel (%p390) target = $region36
        $region35: #{tpu_custom_call.1} parent=11 // pred_region
          _
        $region36: #{tpu_custom_call.1} parent=11 // pred_fallthru
          _
        // Predicated region
        $region37: #{tpu_custom_call.1} parent=11 // pred_check
          %p393 = pneg %p238
        $region38: #{tpu_custom_call.1} parent=11 // pred_check_branch
          %395 = sbr.rel (%p393) target = $region40
        $region39: #{tpu_custom_call.1} parent=11 // pred_region
          _
        $region40: #{tpu_custom_call.1} parent=11 // pred_fallthru
          _
        // Predicated region
        $region41: #{tpu_custom_call.1} parent=11 // pred_check
          %p396 = pneg %p259
        $region42: #{tpu_custom_call.1} parent=11 // pred_check_branch
          %398 = sbr.rel (%p396) target = $region44
        $region43: #{tpu_custom_call.1} parent=11 // pred_region
          _
        $region44: #{tpu_custom_call.1} parent=11 // pred_fallthru
          _
        // Predicated region
        $region45: #{tpu_custom_call.1} parent=11 // pred_check
          %p399 = pneg %p280
        $region46: #{tpu_custom_call.1} parent=11 // pred_check_branch
          %401 = sbr.rel (%p399) target = $region48
        $region47: #{tpu_custom_call.1} parent=11 // pred_region
          %s403 = ssub.s32 16, 16
          %404 = vsyncadd [#allocation4], %s403
          %s406 = sshll.u32 %s10, 4
          %s407 = int_to_ptr.vmem [resolvable:$true] %s406
          %409 = dma.vmem_to_smem %s407, 16, [#allocation2], [#allocation4]
        $region48: #{tpu_custom_call.1} parent=11 // pred_fallthru
          _
      $region12: #{tpu_custom_call.1} parent=5 // pred_fallthru
        _
      %p410 = scmp.lt.s32.totalorder %s27, 8
      // Predicated region
      $region49: #{tpu_custom_call.1} parent=5 // pred_check
        %p411 = pneg %p410
      $region50: #{tpu_custom_call.1} parent=5 // pred_check_branch
        %413 = sbr.rel (%p411) target = $region52
      $region51: #{tpu_custom_call.1} parent=5 // pred_region
        // Predicated region
        $region53: #{tpu_custom_call.1} parent=51 // pred_check
          %p414 = pneg %p59
        $region54: #{tpu_custom_call.1} parent=51 // pred_check_branch
          %416 = sbr.rel (%p414) target = $region56
        $region55: #{tpu_custom_call.1} parent=51 // pred_region
          %p417 = scmp.lt.s32.totalorder %s34, 1
          %s418 = scalar_select %p417, %s34, 1
          %s419 = smul.addr %s418, 4
          %s420 = scalar_lea.vmem %s0, %s419
        $region56: #{tpu_custom_call.1} parent=51 // pred_fallthru
          _
        // Predicated region
        $region57: #{tpu_custom_call.1} parent=51 // pred_check
          %p421 = pneg %p85
        $region58: #{tpu_custom_call.1} parent=51 // pred_check_branch
          %423 = sbr.rel (%p421) target = $region60
        $region59: #{tpu_custom_call.1} parent=51 // pred_region
          %p424 = scmp.lt.s32.totalorder %s34, 1
          %s425 = scalar_select %p424, %s34, 1
          %s426 = smul.addr %s425, 4
          %s427 = scalar_lea.vmem %s1, %s426
        $region60: #{tpu_custom_call.1} parent=51 // pred_fallthru
          _
      $region52: #{tpu_custom_call.1} parent=5 // pred_fallthru
        _
      %p428 = scmp.le.s32.totalorder 1, %s27
      %p429 = scmp.lt.s32.totalorder %s27, 9
      %p430 = pnand %p428, %p429
      %p431 = pneg %p430
      // Predicated region
      $region61: #{tpu_custom_call.1} parent=5 // pred_check
        _
      $region62: #{tpu_custom_call.1} parent=5 // pred_check_branch
        %433 = sbr.rel (%p430) target = $region64
      $region63: #{tpu_custom_call.1} parent=5 // pred_region
        %s434 = ssub.s32 %s27, 1
        // Predicated region
        $region65: #{tpu_custom_call.1} parent=63 // pred_check
          %p435 = pneg %p280
        $region66: #{tpu_custom_call.1} parent=63 // pred_check_branch
          %437 = sbr.rel (%p435) target = $region68
        $region67: #{tpu_custom_call.1} parent=63 // pred_region
          %438 = dma.done [#allocation4], 16
        $region68: #{tpu_custom_call.1} parent=63 // pred_fallthru
          _
        %439 = sfence
        %p440 = scmp.lt.s32.totalorder %s36, 1
        %s441 = scalar_select %p440, %s36, 1
        %s442 = smul.addr %s441, 4
        %s443 = scalar_lea.vmem %s0, %s442
        %p444 = pneg %p65
        %p445 = pneg %p62
        %p446 = scmp.lt.s32.totalorder %s36, 1
        %s447 = scalar_select %p446, %s36, 1
        %s448 = smul.addr %s447, 4
        %s449 = scalar_lea.vmem %s1, %s448
        %p450 = pneg %p91
        %p451 = pneg %p88
        %p452 = pneg %p112
        %p453 = pneg %p109
        %p454 = pneg %p133
        %p455 = pneg %p130
        %p456 = pneg %p154
        %p457 = pneg %p151
        %p458 = pneg %p175
        %p459 = pneg %p172
        %p460 = pneg %p196
        %p461 = pneg %p193
        %p462 = pneg %p217
        %p463 = pneg %p214
        %p464 = pneg %p238
        %p465 = pneg %p235
        %p466 = pneg %p259
        %p467 = pneg %p256
        %p468 = pneg %p280
        %p469 = pneg %p277
        %p470 = pneg %p306
        %p471 = pneg %p303
        %s472 = sand.u32 %s293, 1
        %s473 = scalar_lea.sflag [#allocation3], %s472
        %s474 = sand.u32 %s293, 1
        %s475 = smul.addr %s474, 8
        %s476 = scalar_lea.vmem [#allocation5], %s475
        %p477 = pneg %p332
        %p478 = pneg %p329
        %s479 = sand.u32 %s32, 1
        %s480 = scalar_lea.sflag [#allocation7], %s479
        %s481 = sand.u32 %s319, 1
        %s482 = smul.addr %s481, 8
        %s483 = scalar_lea.vmem [#allocation6], %s482
        %p484 = pneg %p360
        %p485 = pneg %p357
        %s486 = sand.u32 %s32, 1
        %s487 = scalar_lea.sflag [#allocation7], %s486
        %s488 = sand.u32 %s347, 1
        %s489 = smul.addr %s488, 4
        %s490 = scalar_lea.vmem [#allocation8], %s489
        %p491 = scmp.lt.s32.totalorder %s36, 1
        %s492 = scalar_select %p491, %s36, 1
        %s493 = smul.addr %s492, 4
        %s494 = scalar_lea.vmem %s0, %s493
        %p495 = scmp.lt.s32.totalorder %s36, 1
        %s496 = scalar_select %p495, %s36, 1
        %s497 = smul.addr %s496, 4
        %s498 = scalar_lea.vmem %s1, %s497
        %v500 = vld [vmem:[%s494] sm:$0xf]
        %v501 = vld [vmem:[%s498] sm:$0xf]
        %s502 = sld [smem:[#allocation2]]
        %s503 = sld [smem:[#allocation2 + $0x1]]
        %s504 = sld [smem:[#allocation2 + $0x2]]
        %s505 = sld [smem:[#allocation2 + $0x3]]
        %s506 = smul.u32 %s37, 4
        %s507 = smul.addr %s506, 4
        %s508 = scalar_lea.vmem %s2, %s507
        %v509 = vld [vmem:[%s508] sm:$0xf]
        %v510 = vld [vmem:[%s508 + $0x4] sm:$0xf]
        %v511 = vld [vmem:[%s508 + $0x8] sm:$0xf]
        %v512 = vld [vmem:[%s508 + $0xc] sm:$0xf]
        %s513 = scalar_lea.vmem %s3, %s37
        %v514 = vld [vmem:[%s513] sm:$0x1]
        %v516 = vlaneseq
        %v517 = vshrl.u32 %v516, 7
        %v518 = vsub.s32 0, %v517
        %v519 = vrot.slane %v514, %v518
        %v525 = vunpack.c.l.b16 %v509
        %v526 = vunpack.c.l.b16 %v510
        %v527 = vunpack.c.l.b16 %v511
        %v528 = vunpack.c.l.b16 %v512
        %v529 = vpack.c.b16 %v526, %v525
        %v530 = vpack.c.b16 %v528, %v527
        %vm533 = vcmask 261120
        %v535 = vsel %vm533, %v500, 0
        %537 = vmatprep.subr.bf16.mxu0 0
        %538 = vmatpush1.bf16.msra.mxu0 0
        %539 = vmatprep.subr.bf16.mxu0 0
        %540 = vmatpush1.bf16.msra.mxu0 0
        %541 = vmatprep.subr.bf16.mxu0 0
        %542 = vmatpush1.bf16.msra.mxu0 0
        %543 = vmatprep.subr.bf16.mxu0 0
        %544 = vmatpush1.bf16.msra.mxu0 0
        %545 = vmatprep.subr.bf16.mxu0 0
        %546 = vmatpush1.bf16.msra.mxu0 0
        %547 = vmatprep.subr.bf16.mxu0 0
        %548 = vmatpush1.bf16.msra.mxu0 0
        %549 = vmatprep.subr.bf16.mxu0 0
        %550 = vmatpush1.bf16.msra.mxu0 %v530
        %551 = vmatprep.subr.bf16.mxu0 0
        %552 = vmatpush1.bf16.msra.mxu0 %v529
        %553 = vmatprep.subr.bf16.mxu0 0
        %554 = vmatpush2.bf16.msra.mxu0 0
        %555 = vmatprep.subr.bf16.mxu0 0
        %556 = vmatpush2.bf16.msra.mxu0 0
        %557 = vmatprep.subr.bf16.mxu0 0
        %558 = vmatpush2.bf16.msra.mxu0 0
        %559 = vmatprep.subr.bf16.mxu0 0
        %560 = vmatpush2.bf16.msra.mxu0 0
        %561 = vmatprep.subr.bf16.mxu0 0
        %562 = vmatpush2.bf16.msra.mxu0 0
        %563 = vmatprep.subr.bf16.mxu0 0
        %564 = vmatpush2.bf16.msra.mxu0 0
        %565 = vmatprep.subr.bf16.mxu0 0
        %566 = vmatpush2.bf16.msra.mxu0 0
        %567 = vmatprep.subr.bf16.mxu0 0
        %568 = vmatpush2.bf16.msra.mxu0 0
        %569 = vmatprep.mubr.bf16.mxu0 0
        %570 = vmatmul.mubr.bf16.gmra.mxu0 %v535
        %v571 = vpop.f32.mrf.mxu0
        %v572 = vadd.f32 %v519, %v571
        %v573 = vpop.f32.mrf.mxu0
        %v574 = vpop.f32.mrf.mxu0
        %v575 = vpop.f32.mrf.mxu0
        %576 = vdwg.mxu0
        %s577 = smul.addr %s506, 4
        %s578 = scalar_lea.vmem %s4, %s577
        %v579 = vld [vmem:[%s578] sm:$0xf]
        %v580 = vld [vmem:[%s578 + $0x4] sm:$0xf]
        %v581 = vld [vmem:[%s578 + $0x8] sm:$0xf]
        %v582 = vld [vmem:[%s578 + $0xc] sm:$0xf]
        %s583 = scalar_lea.vmem %s5, %s37
        %v584 = vld [vmem:[%s583] sm:$0x1]
        %v586 = vlaneseq
        %v587 = vshrl.u32 %v586, 7
        %v588 = vsub.s32 0, %v587
        %v589 = vrot.slane %v584, %v588
        %v595 = vunpack.c.l.b16 %v579
        %v596 = vunpack.c.l.b16 %v580
        %v597 = vunpack.c.l.b16 %v581
        %v598 = vunpack.c.l.b16 %v582
        %v599 = vpack.c.b16 %v596, %v595
        %v600 = vpack.c.b16 %v598, %v597
        %v604 = vsel %vm533, %v501, 0
        %606 = vmatprep.subr.bf16.mxu0 0
        %607 = vmatpush1.bf16.msra.mxu0 0
        %608 = vmatprep.subr.bf16.mxu0 0
        %609 = vmatpush1.bf16.msra.mxu0 0
        %610 = vmatprep.subr.bf16.mxu0 0
        %611 = vmatpush1.bf16.msra.mxu0 0
        %612 = vmatprep.subr.bf16.mxu0 0
        %613 = vmatpush1.bf16.msra.mxu0 0
        %614 = vmatprep.subr.bf16.mxu0 0
        %615 = vmatpush1.bf16.msra.mxu0 0
        %616 = vmatprep.subr.bf16.mxu0 0
        %617 = vmatpush1.bf16.msra.mxu0 0
        %618 = vmatprep.subr.bf16.mxu0 0
        %619 = vmatpush1.bf16.msra.mxu0 %v600
        %620 = vmatprep.subr.bf16.mxu0 0
        %621 = vmatpush1.bf16.msra.mxu0 %v599
        %622 = vmatprep.subr.bf16.mxu0 0
        %623 = vmatpush2.bf16.msra.mxu0 0
        %624 = vmatprep.subr.bf16.mxu0 0
        %625 = vmatpush2.bf16.msra.mxu0 0
        %626 = vmatprep.subr.bf16.mxu0 0
        %627 = vmatpush2.bf16.msra.mxu0 0
        %628 = vmatprep.subr.bf16.mxu0 0
        %629 = vmatpush2.bf16.msra.mxu0 0
        %630 = vmatprep.subr.bf16.mxu0 0
        %631 = vmatpush2.bf16.msra.mxu0 0
        %632 = vmatprep.subr.bf16.mxu0 0
        %633 = vmatpush2.bf16.msra.mxu0 0
        %634 = vmatprep.subr.bf16.mxu0 0
        %635 = vmatpush2.bf16.msra.mxu0 0
        %636 = vmatprep.subr.bf16.mxu0 0
        %637 = vmatpush2.bf16.msra.mxu0 0
        %638 = vmatprep.mubr.bf16.mxu0 0
        %639 = vmatmul.mubr.bf16.gmra.mxu0 %v604
        %v640 = vpop.f32.mrf.mxu0
        %v641 = vadd.f32 %v589, %v640
        %v642 = vpop.f32.mrf.mxu0
        %v643 = vpop.f32.mrf.mxu0
        %v644 = vpop.f32.mrf.mxu0
        %645 = vdwg.mxu0
        %v646 = vpack.c.bf16 %v572, %v572
        %v647 = vpack.c.bf16 %v641, %v641
        %v649 = vrot.slane %v647, 4
        %vm650 = vcmask 1043456
        %v653 = vsel %vm650, %v646, %v649
        %655 = vrot.lane.b32.xlu0 %v653, 120
        %v656 = vpop.permute.xlu0 %655
        %vm657 = vcmask 64512
        %v658 = vsel %vm657, %v646, 0
        %v661 = vsel %vm657, %v656, 0
        %663 = vmatprep.subr.bf16.mxu0 0
        %664 = vmatpush1.bf16.xpose.msra.mxu0 0
        %665 = vmatprep.subr.bf16.mxu0 0
        %666 = vmatpush1.bf16.xpose.msra.mxu0 0
        %667 = vmatprep.subr.bf16.mxu0 0
        %668 = vmatpush1.bf16.xpose.msra.mxu0 0
        %669 = vmatprep.subr.bf16.mxu0 0
        %670 = vmatpush1.bf16.xpose.msra.mxu0 0
        %671 = vmatprep.subr.bf16.mxu0 0
        %672 = vmatpush1.bf16.xpose.msra.mxu0 0
        %673 = vmatprep.subr.bf16.mxu0 0
        %674 = vmatpush1.bf16.xpose.msra.mxu0 0
        %675 = vmatprep.subr.bf16.mxu0 0
        %676 = vmatpush1.bf16.xpose.msra.mxu0 0
        %677 = vmatprep.subr.bf16.mxu0 0
        %678 = vmatpush1.bf16.xpose.msra.mxu0 %v661
        %679 = vmatprep.subr.bf16.mxu0 0
        %680 = vmatpush2.bf16.xpose.msra.mxu0 0
        %681 = vmatprep.subr.bf16.mxu0 0
        %682 = vmatpush2.bf16.xpose.msra.mxu0 0
        %683 = vmatprep.subr.bf16.mxu0 0
        %684 = vmatpush2.bf16.xpose.msra.mxu0 0
        %685 = vmatprep.subr.bf16.mxu0 0
        %686 = vmatpush2.bf16.xpose.msra.mxu0 0
        %687 = vmatprep.subr.bf16.mxu0 0
        %688 = vmatpush2.bf16.xpose.msra.mxu0 0
        %689 = vmatprep.subr.bf16.mxu0 0
        %690 = vmatpush2.bf16.xpose.msra.mxu0 0
        %691 = vmatprep.subr.bf16.mxu0 0
        %692 = vmatpush2.bf16.xpose.msra.mxu0 0
        %693 = vmatprep.subr.bf16.mxu0 0
        %694 = vmatpush2.bf16.xpose.msra.mxu0 0
        %695 = vmatprep.mubr.bf16.mxu0 0
        %696 = vmatmul.mubr.bf16.gmra.mxu0 %v658
        %v697 = vpop.f32.mrf.mxu0
        %v698 = vadd.f32 0.0, %v697
        %v699 = vpop.f32.mrf.mxu0
        %v700 = vpop.f32.mrf.mxu0
        %v701 = vpop.f32.mrf.mxu0
        %702 = vdwg.mxu0
        %v704 = vsel %vm657, %v647, 0
        %706 = vmatprep.subr.bf16.mxu0 0
        %707 = vmatpush1.bf16.xpose.msra.mxu0 0
        %708 = vmatprep.subr.bf16.mxu0 0
        %709 = vmatpush1.bf16.xpose.msra.mxu0 0
        %710 = vmatprep.subr.bf16.mxu0 0
        %711 = vmatpush1.bf16.xpose.msra.mxu0 0
        %712 = vmatprep.subr.bf16.mxu0 0
        %713 = vmatpush1.bf16.xpose.msra.mxu0 0
        %714 = vmatprep.subr.bf16.mxu0 0
        %715 = vmatpush1.bf16.xpose.msra.mxu0 0
        %716 = vmatprep.subr.bf16.mxu0 0
        %717 = vmatpush1.bf16.xpose.msra.mxu0 0
        %718 = vmatprep.subr.bf16.mxu0 0
        %719 = vmatpush1.bf16.xpose.msra.mxu0 0
        %720 = vmatprep.subr.bf16.mxu0 0
        %721 = vmatpush1.bf16.xpose.msra.mxu0 %v661
        %722 = vmatprep.subr.bf16.mxu0 0
        %723 = vmatpush2.bf16.xpose.msra.mxu0 0
        %724 = vmatprep.subr.bf16.mxu0 0
        %725 = vmatpush2.bf16.xpose.msra.mxu0 0
        %726 = vmatprep.subr.bf16.mxu0 0
        %727 = vmatpush2.bf16.xpose.msra.mxu0 0
        %728 = vmatprep.subr.bf16.mxu0 0
        %729 = vmatpush2.bf16.xpose.msra.mxu0 0
        %730 = vmatprep.subr.bf16.mxu0 0
        %731 = vmatpush2.bf16.xpose.msra.mxu0 0
        %732 = vmatprep.subr.bf16.mxu0 0
        %733 = vmatpush2.bf16.xpose.msra.mxu0 0
        %734 = vmatprep.subr.bf16.mxu0 0
        %735 = vmatpush2.bf16.xpose.msra.mxu0 0
        %736 = vmatprep.subr.bf16.mxu0 0
        %737 = vmatpush2.bf16.xpose.msra.mxu0 0
        %738 = vmatprep.mubr.bf16.mxu0 0
        %739 = vmatmul.mubr.bf16.gmra.mxu0 %v704
        %v740 = vpop.f32.mrf.mxu0
        %v741 = vadd.f32 0.0, %v740
        %v742 = vpop.f32.mrf.mxu0
        %v743 = vpop.f32.mrf.mxu0
        %v744 = vpop.f32.mrf.mxu0
        %745 = vdwg.mxu0
        %v746 = vsel %vm657, %v698, -inf
        %747 = vmax.xlane.f32.xlu0 %v746
        %v748 = vpop.xlane.xlu0 %747
        %v749 = vsub.f32 %v698, %v748
        %v750 = vpack.c.bf16 %v749, %v749
        %v752 = vmul.bf16 %v750, 1069105081
        %v753 = vpow.bf16.pop %v752
        %v754 = vunpack.c.l.bf16 %v753
        %v755 = vsel %vm657, %v754, 0.0
        %756 = vadd.xlane.f32.xlu0 %v755
        %v757 = vpop.xlane.xlu0 %756
        %vm758 = vcmask 130112
        %v759 = vsel %vm758, %v698, -inf
        %760 = vmax.xlane.f32.xlu0 %v759
        %v761 = vpop.xlane.xlu0 %760
        %v762 = vsub.f32 %v698, %v761
        %v763 = vpack.c.bf16 %v762, %v762
        %v765 = vmul.bf16 %v763, 1069105081
        %v766 = vpow.bf16.pop %v765
        %v767 = vunpack.c.l.bf16 %v766
        %769 = vrot.lane.b32.xlu0 %v767, 120
        %v770 = vpop.permute.xlu0 %769
        %v772 = vsel %vm657, %v770, 0.0
        %773 = vadd.xlane.f32.xlu0 %v772
        %v774 = vpop.xlane.xlu0 %773
        %v775 = vsel %vm657, %v741, -inf
        %776 = vmax.xlane.f32.xlu0 %v775
        %v777 = vpop.xlane.xlu0 %776
        %v778 = vsub.f32 %v741, %v777
        %v779 = vpack.c.bf16 %v778, %v778
        %v781 = vmul.bf16 %v779, 1069105081
        %v782 = vpow.bf16.pop %v781
        %v783 = vunpack.c.l.bf16 %v782
        %v784 = vsel %vm657, %v783, 0.0
        %785 = vadd.xlane.f32.xlu0 %v784
        %v786 = vpop.xlane.xlu0 %785
        %v787 = vsel %vm758, %v741, -inf
        %788 = vmax.xlane.f32.xlu0 %v787
        %v789 = vpop.xlane.xlu0 %788
        %v790 = vsub.f32 %v741, %v789
        %v791 = vpack.c.bf16 %v790, %v790
        %v793 = vmul.bf16 %v791, 1069105081
        %v794 = vpow.bf16.pop %v793
        %v795 = vunpack.c.l.bf16 %v794
        %797 = vrot.lane.b32.xlu0 %v795, 120
        %v798 = vpop.permute.xlu0 %797
        %v800 = vsel %vm657, %v798, 0.0
        %801 = vadd.xlane.f32.xlu0 %v800
        %v802 = vpop.xlane.xlu0 %801
        %v803 = vrcp.pop %v786
        %v804 = vmul.f32 1.0, %v803
        %v805 = vmul.f32 %v783, %v804
        %v806 = vpack.c.bf16 %v805, %v805
        %vm807 = vcmask 60416
        %808 = vst.msk [vmem:[%s490] sm:$0xf] %vm807, %v806
        %v809 = vrcp.pop %v757
        %v810 = vrcp.pop %v774
        %v811 = vrcp.pop %v802
        %813 = vrot.lane.b32.xlu0 %v646, 112
        %v814 = vpop.permute.xlu0 %813
        %v816 = vsel %vm657, %v753, 0
        %v819 = vsel %vm650, %v814, 0
        %821 = vmatprep.subr.bf16.mxu0 0
        %822 = vmatpush1.bf16.msra.mxu0 0
        %823 = vmatprep.subr.bf16.mxu0 0
        %824 = vmatpush1.bf16.msra.mxu0 0
        %825 = vmatprep.subr.bf16.mxu0 0
        %826 = vmatpush1.bf16.msra.mxu0 0
        %827 = vmatprep.subr.bf16.mxu0 0
        %828 = vmatpush1.bf16.msra.mxu0 0
        %829 = vmatprep.subr.bf16.mxu0 0
        %830 = vmatpush1.bf16.msra.mxu0 0
        %831 = vmatprep.subr.bf16.mxu0 0
        %832 = vmatpush1.bf16.msra.mxu0 0
        %833 = vmatprep.subr.bf16.mxu0 0
        %834 = vmatpush1.bf16.msra.mxu0 0
        %835 = vmatprep.subr.bf16.mxu0 0
        %836 = vmatpush1.bf16.msra.mxu0 %v819
        %837 = vmatprep.subr.bf16.mxu0 0
        %838 = vmatpush2.bf16.msra.mxu0 0
        %839 = vmatprep.subr.bf16.mxu0 0
        %840 = vmatpush2.bf16.msra.mxu0 0
        %841 = vmatprep.subr.bf16.mxu0 0
        %842 = vmatpush2.bf16.msra.mxu0 0
        %843 = vmatprep.subr.bf16.mxu0 0
        %844 = vmatpush2.bf16.msra.mxu0 0
        %845 = vmatprep.subr.bf16.mxu0 0
        %846 = vmatpush2.bf16.msra.mxu0 0
        %847 = vmatprep.subr.bf16.mxu0 0
        %848 = vmatpush2.bf16.msra.mxu0 0
        %849 = vmatprep.subr.bf16.mxu0 0
        %850 = vmatpush2.bf16.msra.mxu0 0
        %851 = vmatprep.subr.bf16.mxu0 0
        %852 = vmatpush2.bf16.msra.mxu0 0
        %853 = vmatprep.mubr.bf16.mxu0 0
        %854 = vmatmul.mubr.bf16.gmra.mxu0 %v816
        %v855 = vpop.f32.mrf.mxu0
        %v856 = vadd.f32 0.0, %v855
        %v857 = vpop.f32.mrf.mxu0
        %v858 = vpop.f32.mrf.mxu0
        %v859 = vpop.f32.mrf.mxu0
        %860 = vdwg.mxu0
        %v861 = vstv %s502
        %v862 = vmul.f32 %v861, %v809
        %v863 = vmul.f32 %v856, %v862
        %865 = vrot.lane.b32.xlu0 %v766, 120
        %v866 = vpop.permute.xlu0 %865
        %867 = vrot.lane.b32.xlu0 %v647, 112
        %v868 = vpop.permute.xlu0 %867
        %v870 = vsel %vm657, %v866, 0
        %v873 = vsel %vm650, %v868, 0
        %875 = vmatprep.subr.bf16.mxu0 0
        %876 = vmatpush1.bf16.msra.mxu0 0
        %877 = vmatprep.subr.bf16.mxu0 0
        %878 = vmatpush1.bf16.msra.mxu0 0
        %879 = vmatprep.subr.bf16.mxu0 0
        %880 = vmatpush1.bf16.msra.mxu0 0
        %881 = vmatprep.subr.bf16.mxu0 0
        %882 = vmatpush1.bf16.msra.mxu0 0
        %883 = vmatprep.subr.bf16.mxu0 0
        %884 = vmatpush1.bf16.msra.mxu0 0
        %885 = vmatprep.subr.bf16.mxu0 0
        %886 = vmatpush1.bf16.msra.mxu0 0
        %887 = vmatprep.subr.bf16.mxu0 0
        %888 = vmatpush1.bf16.msra.mxu0 0
        %889 = vmatprep.subr.bf16.mxu0 0
        %890 = vmatpush1.bf16.msra.mxu0 %v873
        %891 = vmatprep.subr.bf16.mxu0 0
        %892 = vmatpush2.bf16.msra.mxu0 0
        %893 = vmatprep.subr.bf16.mxu0 0
        %894 = vmatpush2.bf16.msra.mxu0 0
        %895 = vmatprep.subr.bf16.mxu0 0
        %896 = vmatpush2.bf16.msra.mxu0 0
        %897 = vmatprep.subr.bf16.mxu0 0
        %898 = vmatpush2.bf16.msra.mxu0 0
        %899 = vmatprep.subr.bf16.mxu0 0
        %900 = vmatpush2.bf16.msra.mxu0 0
        %901 = vmatprep.subr.bf16.mxu0 0
        %902 = vmatpush2.bf16.msra.mxu0 0
        %903 = vmatprep.subr.bf16.mxu0 0
        %904 = vmatpush2.bf16.msra.mxu0 0
        %905 = vmatprep.subr.bf16.mxu0 0
        %906 = vmatpush2.bf16.msra.mxu0 0
        %907 = vmatprep.mubr.bf16.mxu0 0
        %908 = vmatmul.mubr.bf16.gmra.mxu0 %v870
        %v909 = vpop.f32.mrf.mxu0
        %v910 = vadd.f32 0.0, %v909
        %v911 = vpop.f32.mrf.mxu0
        %v912 = vpop.f32.mrf.mxu0
        %v913 = vpop.f32.mrf.mxu0
        %914 = vdwg.mxu0
        %v915 = vstv %s503
        %v916 = vmul.f32 %v915, %v810
        %v917 = vmul.f32 %v910, %v916
        %v918 = vadd.f32 %v863, %v917
        %920 = vrot.lane.b32.xlu0 %v794, 120
        %v921 = vpop.permute.xlu0 %920
        %v923 = vsel %vm657, %v921, 0
        %925 = vmatprep.subr.bf16.mxu0 0
        %926 = vmatpush1.bf16.msra.mxu0 0
        %927 = vmatprep.subr.bf16.mxu0 0
        %928 = vmatpush1.bf16.msra.mxu0 0
        %929 = vmatprep.subr.bf16.mxu0 0
        %930 = vmatpush1.bf16.msra.mxu0 0
        %931 = vmatprep.subr.bf16.mxu0 0
        %932 = vmatpush1.bf16.msra.mxu0 0
        %933 = vmatprep.subr.bf16.mxu0 0
        %934 = vmatpush1.bf16.msra.mxu0 0
        %935 = vmatprep.subr.bf16.mxu0 0
        %936 = vmatpush1.bf16.msra.mxu0 0
        %937 = vmatprep.subr.bf16.mxu0 0
        %938 = vmatpush1.bf16.msra.mxu0 0
        %939 = vmatprep.subr.bf16.mxu0 0
        %940 = vmatpush1.bf16.msra.mxu0 %v873
        %941 = vmatprep.subr.bf16.mxu0 0
        %942 = vmatpush2.bf16.msra.mxu0 0
        %943 = vmatprep.subr.bf16.mxu0 0
        %944 = vmatpush2.bf16.msra.mxu0 0
        %945 = vmatprep.subr.bf16.mxu0 0
        %946 = vmatpush2.bf16.msra.mxu0 0
        %947 = vmatprep.subr.bf16.mxu0 0
        %948 = vmatpush2.bf16.msra.mxu0 0
        %949 = vmatprep.subr.bf16.mxu0 0
        %950 = vmatpush2.bf16.msra.mxu0 0
        %951 = vmatprep.subr.bf16.mxu0 0
        %952 = vmatpush2.bf16.msra.mxu0 0
        %953 = vmatprep.subr.bf16.mxu0 0
        %954 = vmatpush2.bf16.msra.mxu0 0
        %955 = vmatprep.subr.bf16.mxu0 0
        %956 = vmatpush2.bf16.msra.mxu0 0
        %957 = vmatprep.mubr.bf16.mxu0 0
        %958 = vmatmul.mubr.bf16.gmra.mxu0 %v923
        %v959 = vpop.f32.mrf.mxu0
        %v960 = vadd.f32 0.0, %v959
        %v961 = vpop.f32.mrf.mxu0
        %v962 = vpop.f32.mrf.mxu0
        %v963 = vpop.f32.mrf.mxu0
        %964 = vdwg.mxu0
        %v965 = vstv %s504
        %v966 = vmul.f32 %v965, %v811
        %v967 = vmul.f32 %v960, %v966
        %v969 = vsel %vm657, %v782, 0
        %971 = vmatprep.subr.bf16.mxu0 0
        %972 = vmatpush1.bf16.msra.mxu0 0
        %973 = vmatprep.subr.bf16.mxu0 0
        %974 = vmatpush1.bf16.msra.mxu0 0
        %975 = vmatprep.subr.bf16.mxu0 0
        %976 = vmatpush1.bf16.msra.mxu0 0
        %977 = vmatprep.subr.bf16.mxu0 0
        %978 = vmatpush1.bf16.msra.mxu0 0
        %979 = vmatprep.subr.bf16.mxu0 0
        %980 = vmatpush1.bf16.msra.mxu0 0
        %981 = vmatprep.subr.bf16.mxu0 0
        %982 = vmatpush1.bf16.msra.mxu0 0
        %983 = vmatprep.subr.bf16.mxu0 0
        %984 = vmatpush1.bf16.msra.mxu0 0
        %985 = vmatprep.subr.bf16.mxu0 0
        %986 = vmatpush1.bf16.msra.mxu0 %v819
        %987 = vmatprep.subr.bf16.mxu0 0
        %988 = vmatpush2.bf16.msra.mxu0 0
        %989 = vmatprep.subr.bf16.mxu0 0
        %990 = vmatpush2.bf16.msra.mxu0 0
        %991 = vmatprep.subr.bf16.mxu0 0
        %992 = vmatpush2.bf16.msra.mxu0 0
        %993 = vmatprep.subr.bf16.mxu0 0
        %994 = vmatpush2.bf16.msra.mxu0 0
        %995 = vmatprep.subr.bf16.mxu0 0
        %996 = vmatpush2.bf16.msra.mxu0 0
        %997 = vmatprep.subr.bf16.mxu0 0
        %998 = vmatpush2.bf16.msra.mxu0 0
        %999 = vmatprep.subr.bf16.mxu0 0
        %1000 = vmatpush2.bf16.msra.mxu0 0
        %1001 = vmatprep.subr.bf16.mxu0 0
        %1002 = vmatpush2.bf16.msra.mxu0 0
        %1003 = vmatprep.mubr.bf16.mxu0 0
        %1004 = vmatmul.mubr.bf16.gmra.mxu0 %v969
        %v1005 = vpop.f32.mrf.mxu0
        %v1006 = vadd.f32 0.0, %v1005
        %v1007 = vpop.f32.mrf.mxu0
        %v1008 = vpop.f32.mrf.mxu0
        %v1009 = vpop.f32.mrf.mxu0
        %1010 = vdwg.mxu0
        %v1011 = vstv %s505
        %v1012 = vmul.f32 %v1011, %v804
        %v1013 = vmul.f32 %v1006, %v1012
        %v1014 = vadd.f32 %v967, %v1013
        %p1015 = scmp.eq.s32.totalorder %s37, 0
        // Predicated region
        $region69: #{tpu_custom_call.1} parent=63 // pred_check
          %p1016 = pneg %p1015
        $region70: #{tpu_custom_call.1} parent=63 // pred_check_branch
          %1018 = sbr.rel (%p1016) target = $region72
        $region71: #{tpu_custom_call.1} parent=63 // pred_region
          %s1019 = sadd.f32 %s502, %s503
          %v1020 = vld [vmem:[%s7] sm:$0x1]
          %v1021 = vstv %s1019
          %v1022 = vmul.f32 %v1021, %v1020
          %v1024 = vlaneseq
          %v1025 = vshrl.u32 %v1024, 7
          %v1026 = vsub.s32 0, %v1025
          %v1027 = vrot.slane %v1022, %v1026
          %1029 = vst.msk [vmem:[%s476] sm:$0xff] %vm533, %v1027
          %s1030 = sadd.f32 %s504, %s505
          %v1031 = vld [vmem:[%s9] sm:$0x1]
          %v1032 = vstv %s1030
          %v1033 = vmul.f32 %v1032, %v1031
          %v1035 = vlaneseq
          %v1036 = vshrl.u32 %v1035, 7
          %v1037 = vsub.s32 0, %v1036
          %v1038 = vrot.slane %v1033, %v1037
          %1040 = vst.msk [vmem:[%s483] sm:$0xff] %vm533, %v1038
        $region72: #{tpu_custom_call.1} parent=63 // pred_fallthru
          _
        %v1041 = vld [vmem:[%s476] sm:$0xff]
        %v1042 = vpack.c.bf16 %v918, %v918
        %s1043 = smul.addr %s37, 4
        %s1044 = scalar_lea.vmem %s6, %s1043
        %v1045 = vld [vmem:[%s1044] sm:$0xf]
        %v1047 = vsel %vm657, %v1042, 0
        %v1050 = vsel %vm650, %v1045, 0
        %1052 = vmatprep.subr.bf16.mxu0 0
        %1053 = vmatpush1.bf16.msra.mxu0 0
        %1054 = vmatprep.subr.bf16.mxu0 0
        %1055 = vmatpush1.bf16.msra.mxu0 0
        %1056 = vmatprep.subr.bf16.mxu0 0
        %1057 = vmatpush1.bf16.msra.mxu0 0
        %1058 = vmatprep.subr.bf16.mxu0 0
        %1059 = vmatpush1.bf16.msra.mxu0 0
        %1060 = vmatprep.subr.bf16.mxu0 0
        %1061 = vmatpush1.bf16.msra.mxu0 0
        %1062 = vmatprep.subr.bf16.mxu0 0
        %1063 = vmatpush1.bf16.msra.mxu0 0
        %1064 = vmatprep.subr.bf16.mxu0 0
        %1065 = vmatpush1.bf16.msra.mxu0 0
        %1066 = vmatprep.subr.bf16.mxu0 0
        %1067 = vmatpush1.bf16.msra.mxu0 %v1050
        %1068 = vmatprep.subr.bf16.mxu0 0
        %1069 = vmatpush2.bf16.msra.mxu0 0
        %1070 = vmatprep.subr.bf16.mxu0 0
        %1071 = vmatpush2.bf16.msra.mxu0 0
        %1072 = vmatprep.subr.bf16.mxu0 0
        %1073 = vmatpush2.bf16.msra.mxu0 0
        %1074 = vmatprep.subr.bf16.mxu0 0
        %1075 = vmatpush2.bf16.msra.mxu0 0
        %1076 = vmatprep.subr.bf16.mxu0 0
        %1077 = vmatpush2.bf16.msra.mxu0 0
        %1078 = vmatprep.subr.bf16.mxu0 0
        %1079 = vmatpush2.bf16.msra.mxu0 0
        %1080 = vmatprep.subr.bf16.mxu0 0
        %1081 = vmatpush2.bf16.msra.mxu0 0
        %1082 = vmatprep.subr.bf16.mxu0 0
        %1083 = vmatpush2.bf16.msra.mxu0 0
        %1084 = vmatprep.mubr.bf16.mxu0 0
        %1085 = vmatmul.mubr.bf16.gmra.mxu0 %v1047
        %v1086 = vpop.f32.mrf.mxu0
        %v1087 = vadd.f32 0.0, %v1086
        %v1088 = vpop.f32.mrf.mxu0
        %v1089 = vpop.f32.mrf.mxu0
        %v1090 = vpop.f32.mrf.mxu0
        %1091 = vdwg.mxu0
        %v1092 = vadd.f32 %v1041, %v1087
        %1093 = vst.msk [vmem:[%s476] sm:$0xff] %vm533, %v1092
        %v1094 = vld [vmem:[%s483] sm:$0xff]
        %v1095 = vpack.c.bf16 %v1014, %v1014
        %s1096 = smul.addr %s37, 4
        %s1097 = scalar_lea.vmem %s8, %s1096
        %v1098 = vld [vmem:[%s1097] sm:$0xf]
        %v1100 = vsel %vm657, %v1095, 0
        %v1103 = vsel %vm650, %v1098, 0
        %1105 = vmatprep.subr.bf16.mxu0 0
        %1106 = vmatpush1.bf16.msra.mxu0 0
        %1107 = vmatprep.subr.bf16.mxu0 0
        %1108 = vmatpush1.bf16.msra.mxu0 0
        %1109 = vmatprep.subr.bf16.mxu0 0
        %1110 = vmatpush1.bf16.msra.mxu0 0
        %1111 = vmatprep.subr.bf16.mxu0 0
        %1112 = vmatpush1.bf16.msra.mxu0 0
        %1113 = vmatprep.subr.bf16.mxu0 0
        %1114 = vmatpush1.bf16.msra.mxu0 0
        %1115 = vmatprep.subr.bf16.mxu0 0
        %1116 = vmatpush1.bf16.msra.mxu0 0
        %1117 = vmatprep.subr.bf16.mxu0 0
        %1118 = vmatpush1.bf16.msra.mxu0 0
        %1119 = vmatprep.subr.bf16.mxu0 0
        %1120 = vmatpush1.bf16.msra.mxu0 %v1103
        %1121 = vmatprep.subr.bf16.mxu0 0
        %1122 = vmatpush2.bf16.msra.mxu0 0
        %1123 = vmatprep.subr.bf16.mxu0 0
        %1124 = vmatpush2.bf16.msra.mxu0 0
        %1125 = vmatprep.subr.bf16.mxu0 0
        %1126 = vmatpush2.bf16.msra.mxu0 0
        %1127 = vmatprep.subr.bf16.mxu0 0
        %1128 = vmatpush2.bf16.msra.mxu0 0
        %1129 = vmatprep.subr.bf16.mxu0 0
        %1130 = vmatpush2.bf16.msra.mxu0 0
        %1131 = vmatprep.subr.bf16.mxu0 0
        %1132 = vmatpush2.bf16.msra.mxu0 0
        %1133 = vmatprep.subr.bf16.mxu0 0
        %1134 = vmatpush2.bf16.msra.mxu0 0
        %1135 = vmatprep.subr.bf16.mxu0 0
        %1136 = vmatpush2.bf16.msra.mxu0 0
        %1137 = vmatprep.mubr.bf16.mxu0 0
        %1138 = vmatmul.mubr.bf16.gmra.mxu0 %v1100
        %v1139 = vpop.f32.mrf.mxu0
        %v1140 = vadd.f32 0.0, %v1139
        %v1141 = vpop.f32.mrf.mxu0
        %v1142 = vpop.f32.mrf.mxu0
        %v1143 = vpop.f32.mrf.mxu0
        %1144 = vdwg.mxu0
        %v1145 = vadd.f32 %v1094, %v1140
        %1146 = vst.msk [vmem:[%s483] sm:$0xff] %vm533, %v1145
        %s1147 = sand.u32 %s293, 1
        %s1148 = scalar_lea.sflag [#allocation3], %s1147
        %s1149 = sand.u32 %s293, 1
        %s1150 = smul.addr %s1149, 8
        %s1151 = scalar_lea.vmem [#allocation5], %s1150
        %s1152 = sand.u32 %s32, 1
        %s1153 = scalar_lea.sflag [#allocation7], %s1152
        %s1154 = sand.u32 %s319, 1
        %s1155 = smul.addr %s1154, 8
        %s1156 = scalar_lea.vmem [#allocation6], %s1155
        %s1157 = sand.u32 %s32, 1
        %s1158 = scalar_lea.sflag [#allocation7], %s1157
        %s1159 = sand.u32 %s347, 1
        %s1160 = smul.addr %s1159, 4
        %s1161 = scalar_lea.vmem [#allocation8], %s1160
        // Predicated region
        $region73: #{tpu_custom_call.1} parent=63 // pred_check
          %p1162 = pneg %p303
        $region74: #{tpu_custom_call.1} parent=63 // pred_check_branch
          %1164 = sbr.rel (%p1162) target = $region76
        $region75: #{tpu_custom_call.1} parent=63 // pred_region
          %s1166 = ssub.s32 128, 128
          %1167 = vsyncadd %s1148, %s1166
          %s1168 = smul.addr %s36, 128
          %s1169 = scalar_lea.hbm %s11, %s1168
          %s1171 = sshll.u32 %s1151, 4
          %s1172 = int_to_ptr.vmem [resolvable:$true] %s1171
          %1174 = dma.vmem_to_hbm [thread:$0]  %s1172, 128, %s1169, %s1148
        $region76: #{tpu_custom_call.1} parent=63 // pred_fallthru
          _
        // Predicated region
        $region77: #{tpu_custom_call.1} parent=63 // pred_check
          %p1175 = pneg %p329
        $region78: #{tpu_custom_call.1} parent=63 // pred_check_branch
          %1177 = sbr.rel (%p1175) target = $region80
        $region79: #{tpu_custom_call.1} parent=63 // pred_region
          %s1179 = ssub.s32 128, 128
          %1180 = vsyncadd %s1153, %s1179
          %s1181 = smul.addr %s36, 128
          %s1182 = scalar_lea.hbm %s12, %s1181
          %s1184 = sshll.u32 %s1156, 4
          %s1185 = int_to_ptr.vmem [resolvable:$true] %s1184
          %1187 = dma.vmem_to_hbm [thread:$0]  %s1185, 128, %s1182, %s1153
        $region80: #{tpu_custom_call.1} parent=63 // pred_fallthru
          _
        // Predicated region
        $region81: #{tpu_custom_call.1} parent=63 // pred_check
          %p1188 = pneg %p357
        $region82: #{tpu_custom_call.1} parent=63 // pred_check_branch
          %1190 = sbr.rel (%p1188) target = $region84
        $region83: #{tpu_custom_call.1} parent=63 // pred_region
          %s1192 = ssub.s32 64, 64
          %1193 = vsyncadd %s1158, %s1192
          %s1194 = smul.addr %s36, 4
          %s1195 = sadd.s32 %s37, %s1194
          %s1196 = smul.addr %s1195, 64
          %s1197 = scalar_lea.hbm %s13, %s1196
          %s1199 = sshll.u32 %s1161, 4
          %s1200 = int_to_ptr.vmem [resolvable:$true] %s1199
          %1202 = dma.vmem_to_hbm [thread:$0]  %s1200, 64, %s1197, %s1158
        $region84: #{tpu_custom_call.1} parent=63 // pred_fallthru
          _
      $region64: #{tpu_custom_call.1} parent=5 // pred_fallthru
        _
      %p1203 = scmp.le.s32.totalorder 2, %s27
      // Predicated region
      $region85: #{tpu_custom_call.1} parent=5 // pred_check
        %p1204 = pneg %p1203
      $region86: #{tpu_custom_call.1} parent=5 // pred_check_branch
        %1206 = sbr.rel (%p1204) target = $region88
      $region87: #{tpu_custom_call.1} parent=5 // pred_region
        %s1207 = ssub.s32 %s27, 2
        // Predicated region
        $region89: #{tpu_custom_call.1} parent=87 // pred_check
          %p1208 = pneg %p309
        $region90: #{tpu_custom_call.1} parent=87 // pred_check_branch
          %1210 = sbr.rel (%p1208) target = $region92
        $region91: #{tpu_custom_call.1} parent=87 // pred_region
          %s1211 = sand.u32 %s294, 1
          %s1212 = scalar_lea.sflag [#allocation3], %s1211
          %s1213 = sand.u32 %s294, 1
          %s1214 = smul.addr %s1213, 8
          %s1215 = scalar_lea.vmem [#allocation5], %s1214
          %1216 = dma.done %s1212, 128
        $region92: #{tpu_custom_call.1} parent=87 // pred_fallthru
          _
        // Predicated region
        $region93: #{tpu_custom_call.1} parent=87 // pred_check
          %p1217 = pneg %p335
        $region94: #{tpu_custom_call.1} parent=87 // pred_check_branch
          %1219 = sbr.rel (%p1217) target = $region96
        $region95: #{tpu_custom_call.1} parent=87 // pred_region
          %s1220 = sand.u32 %s33, 1
          %s1221 = scalar_lea.sflag [#allocation7], %s1220
          %s1222 = sand.u32 %s320, 1
          %s1223 = smul.addr %s1222, 8
          %s1224 = scalar_lea.vmem [#allocation6], %s1223
          %1225 = dma.done %s1221, 128
        $region96: #{tpu_custom_call.1} parent=87 // pred_fallthru
          _
        // Predicated region
        $region97: #{tpu_custom_call.1} parent=87 // pred_check
          %p1226 = pneg %p363
        $region98: #{tpu_custom_call.1} parent=87 // pred_check_branch
          %1228 = sbr.rel (%p1226) target = $region100
        $region99: #{tpu_custom_call.1} parent=87 // pred_region
          %s1229 = sand.u32 %s33, 1
          %s1230 = scalar_lea.sflag [#allocation7], %s1229
          %s1231 = sand.u32 %s348, 1
          %s1232 = smul.addr %s1231, 4
          %s1233 = scalar_lea.vmem [#allocation8], %s1232
          %1234 = dma.done %s1230, 64
        $region100: #{tpu_custom_call.1} parent=87 // pred_fallthru
          _
      $region88: #{tpu_custom_call.1} parent=5 // pred_fallthru
        _
    $region6: #{tpu_custom_call.1} parent=1 // loop_footer
      %s31 = sadd.s32 1, %s27
    $region7: #{tpu_custom_call.1} parent=1 // loop_footer_branch
      %26 = sbr.rel target = $region3
    $region8: #{tpu_custom_call.1} parent=1 // loop_exit
      _
    %1235 = vsyncpa [#allocation3], 1
    %s1236 = scalar_lea.sflag [#allocation3], 1
    %1237 = vsyncpa %s1236, 1
    %1238 = vsyncpa [#allocation7], 1
    %s1239 = scalar_lea.sflag [#allocation7], 1
    %1240 = vsyncpa %s1239, 1
    %1241 = vsyncpa [#allocation4], 1
    %s1242 = scalar_lea.sflag [#allocation4], 1
    %1243 = vsyncpa %s1242, 1

</llo_original>
